<compile_context>
chip_gen: v7x
topology: tpu7x:2x2x1
jax: 0.10.0
libtpu: 0.0.40
codegen_flags: <defaults>
</compile_context>

<pallas_src>
import jax
import jax.numpy as jnp
from jax.experimental import pallas as pl
from jax.experimental.pallas import tpu as pltpu

# small, module-consistent dims (original module uses E=H=100, T<=128)
VOCAB = 50
EMBEDDING_DIM = 32
HIDDEN_DIM = 32
SEQ_LEN = 8
BATCH = 2
FC1_OUT = 50
FC1_PAD = 64      # lane-friendlier padding of the 50-wide fc1
OUT_PAD = 128     # lane-dense output slab; wrapper slices column 0


def _sigmoid_fast(x):
    # 1/(1+exp(-x)) with the reciprocal on the EUP (approx) -> co-issues with
    # VPU work instead of occupying the vector ALU with a divide.
    return pl.reciprocal(1.0 + jnp.exp(-x), approx=True)


def bilstm_kernel(claims_ref, emb_ref,
                  wih_f_ref, wih_b_ref, whh_ref, b_ref,
                  w1_ref, b1_ref, w2_ref, b2_ref,
                  out_ref, xbuf):
    B, T = claims_ref.shape
    H2 = whh_ref.shape[0]          # 2*H : [fwd | bwd] lane-concatenated state

    # --- 1) embedding gather, fused in-kernel (claims live in SMEM) ---------
    for t in range(T):
        for b in range(B):
            tok = claims_ref[b, t]                              # scalar SMEM read
            xbuf[t * B + b:t * B + b + 1, :] = emb_ref[tok]     # (1, E) dynamic row

    x = xbuf[...]                                               # (T*B, E)

    # --- 2) hoisted input projections (both directions), bias folded once ---
    # Gate columns are interleaved [i_f i_b f_f f_b g_f g_b o_f o_b]; the
    # fwd weight matrix fills the *_f column blocks (bwd blocks zero) and
    # vice versa, so one pair of big matmuls covers all T steps.
    gf = jnp.dot(x, wih_f_ref[...], preferred_element_type=jnp.float32) + b_ref[...]
    gb = jnp.dot(x, wih_b_ref[...], preferred_element_type=jnp.float32)

    whh = whh_ref[...]                                          # (2H, 8H) block-diag

    h = jnp.zeros((B, H2), jnp.float32)                         # [h_fwd | h_bwd]
    c = jnp.zeros((B, H2), jnp.float32)

    # --- 3) recurrence: state carried in vregs, fully unrolled (T static) ---
    for t in range(T):
        # fwd chain consumes time t, bwd chain consumes time T-1-t
        g_x = gf[t * B:(t + 1) * B, :] + gb[(T - 1 - t) * B:(T - t) * B, :]
        gates = g_x + jnp.dot(h, whh, preferred_element_type=jnp.float32)
        i_g = _sigmoid_fast(gates[:, 0 * H2:1 * H2])
        f_g = _sigmoid_fast(gates[:, 1 * H2:2 * H2])
        g_g = jnp.tanh(gates[:, 2 * H2:3 * H2])
        o_g = _sigmoid_fast(gates[:, 3 * H2:4 * H2])
        c = f_g * c + i_g * g_g
        h = o_g * jnp.tanh(c)

    # --- 4) MLP head: h already equals cat(h_n[0], h_n[1]) ------------------
    a1 = jnp.maximum(
        jnp.dot(h, w1_ref[...], preferred_element_type=jnp.float32) + b1_ref[...],
        0.0)
    z2 = jnp.dot(a1, w2_ref[...], preferred_element_type=jnp.float32) + b2_ref[...]
    out_ref[...] = _sigmoid_fast(z2)                            # lane-dense (B,128)


def bilstm_forward(claims, kp):
    B, T = claims.shape
    E = kp["emb"].shape[2]
    smem = pl.BlockSpec(memory_space=pltpu.MemorySpace.SMEM)
    vmem = pl.BlockSpec(memory_space=pltpu.MemorySpace.VMEM)
    out = pl.pallas_call(
        bilstm_kernel,
        out_shape=jax.ShapeDtypeStruct((B, OUT_PAD), jnp.float32),
        in_specs=[smem] + [vmem] * 9,
        out_specs=vmem,
        scratch_shapes=[pltpu.VMEM((T * B, E), jnp.float32)],
        # For v7x at larger batch: add a "parallel" batch grid axis
        # (dimension_semantics=("parallel",)) so sequences shard across the
        # two TensorCores; at B=2 a grid would only serialize work on v5e/v6e.
    )(claims.astype(jnp.int32), kp["emb"], kp["wih_f8"], kp["wih_b8"],
      kp["whh"], kp["b"], kp["w1"], kp["b1"], kp["w2"], kp["b2"])
    return out[:, :1]


def pack_params(p):
    """Repack module-like params into the fused/interleaved kernel layout."""
    E, H = EMBEDDING_DIM, HIDDEN_DIM
    H2 = 2 * H
    wih_f8 = jnp.zeros((E, 4 * H2), jnp.float32)
    wih_b8 = jnp.zeros((E, 4 * H2), jnp.float32)
    whh = jnp.zeros((H2, 4 * H2), jnp.float32)
    b = jnp.zeros((1, 4 * H2), jnp.float32)
    for g in range(4):                                   # PyTorch order i, f, g, o
        src = slice(g * H, (g + 1) * H)
        dst_f = slice((2 * g) * H, (2 * g + 1) * H)      # fwd column block
        dst_b = slice((2 * g + 1) * H, (2 * g + 2) * H)  # bwd column block
        wih_f8 = wih_f8.at[:, dst_f].set(p["wih_f"][:, src])
        wih_b8 = wih_b8.at[:, dst_b].set(p["wih_b"][:, src])
        whh = whh.at[:H, dst_f].set(p["whh_f"][:, src])
        whh = whh.at[H:, dst_b].set(p["whh_b"][:, src])
        b = b.at[:, dst_f].set(p["b_f"][:, src])
        b = b.at[:, dst_b].set(p["b_b"][:, src])

    w1p = jnp.zeros((H2, FC1_PAD), jnp.float32).at[:, :FC1_OUT].set(p["w1"])
    b1p = jnp.zeros((1, FC1_PAD), jnp.float32).at[:, :FC1_OUT].set(p["b1"])
    w2p = jnp.zeros((FC1_PAD, OUT_PAD), jnp.float32).at[:FC1_OUT, 0:1].set(p["w2"])
    b2p = jnp.zeros((1, OUT_PAD), jnp.float32).at[:, 0:1].set(p["b2"])
    emb = p["embedding"].astype(jnp.float32).reshape(VOCAB, 1, E)
    return dict(emb=emb, wih_f8=wih_f8, wih_b8=wih_b8, whh=whh, b=b,
                w1=w1p, b1=b1p, w2=w2p, b2=b2p)


def reference_forward(claims, params):
    """Plain-JAX reference matching PyTorch biLSTM_module.forward semantics."""
    H = params["whh_f"].shape[0]
    x = jnp.take(params["embedding"], claims, axis=0).astype(jnp.float32)
    B, T, _ = x.shape

    def cell(x_t, h, c, wih, whh, b):
        gates = x_t @ wih + h @ whh + b
        i = jax.nn.sigmoid(gates[:, :H])
        f = jax.nn.sigmoid(gates[:, H:2 * H])
        g = jnp.tanh(gates[:, 2 * H:3 * H])
        o = jax.nn.sigmoid(gates[:, 3 * H:])
        c = f * c + i * g
        h = o * jnp.tanh(c)
        return h, c

    hf = jnp.zeros((B, H), jnp.float32)
    cf = jnp.zeros((B, H), jnp.float32)
    hb = jnp.zeros((B, H), jnp.float32)
    cb = jnp.zeros((B, H), jnp.float32)
    for t in range(T):
        hf, cf = cell(x[:, t], hf, cf,
                      params["wih_f"], params["whh_f"], params["b_f"])
        hb, cb = cell(x[:, T - 1 - t], hb, cb,
                      params["wih_b"], params["whh_b"], params["b_b"])
    h_cat = jnp.concatenate([hf, hb], axis=1)
    a1 = jnp.maximum(h_cat @ params["w1"] + params["b1"], 0.0)
    return jax.nn.sigmoid(a1 @ params["w2"] + params["b2"])


def init_params(key):
    E, H = EMBEDDING_DIM, HIDDEN_DIM
    ks = jax.random.split(key, 12)
    k = 1.0 / jnp.sqrt(H)

    def u(kk, shape):
        return jax.random.uniform(kk, shape, jnp.float32, -k, k)

    return {
        "embedding": jax.random.normal(ks[0], (VOCAB, E), jnp.float32),
        # forward direction (pre-transposed to (in, 4H)); bias = b_ih + b_hh
        "wih_f": u(ks[1], (E, 4 * H)),
        "whh_f": u(ks[2], (H, 4 * H)),
        "b_f": u(ks[3], (1, 4 * H)) + u(ks[4], (1, 4 * H)),
        # backward direction
        "wih_b": u(ks[5], (E, 4 * H)),
        "whh_b": u(ks[6], (H, 4 * H)),
        "b_b": u(ks[7], (1, 4 * H)) + u(ks[8], (1, 4 * H)),
        # fc1: (2H -> 50), fc2: (50 -> 1)
        "w1": u(ks[9], (2 * H, FC1_OUT)),
        "b1": jnp.zeros((1, FC1_OUT), jnp.float32),
        "w2": u(ks[10], (FC1_OUT, 1)),
        "b2": jnp.zeros((1, 1), jnp.float32),
    }


if __name__ == "__main__":
    key = jax.random.PRNGKey(0)
    pkey, ckey = jax.random.split(key)
    params = init_params(pkey)
    kparams = pack_params(params)
    claims = jax.random.randint(ckey, (BATCH, SEQ_LEN), 0, VOCAB, jnp.int32)

    out = jax.block_until_ready(bilstm_forward(claims, kparams))
    ref = reference_forward(claims, params)

    assert out.shape == (BATCH, 1), out.shape
    assert bool(jnp.all(jnp.isfinite(out)))
    # tolerance 2e-3: kernel uses EUP approx-reciprocal sigmoids in the recurrence
    assert bool(jnp.allclose(out, ref, atol=2e-3, rtol=2e-3)), (out, ref)
    print("KERNEL_OK")
</pallas_src>

<mosaic_0001>
module attributes {stable_mosaic.version = 11 : i64} {
  func.func @bilstm_kernel(%arg0: memref<2x8xi32, #tpu.memory_space<smem>>, %arg1: memref<50x1x32xf32, #tpu.memory_space<vmem>>, %arg2: memref<32x256xf32, #tpu.memory_space<vmem>>, %arg3: memref<32x256xf32, #tpu.memory_space<vmem>>, %arg4: memref<64x256xf32, #tpu.memory_space<vmem>>, %arg5: memref<1x256xf32, #tpu.memory_space<vmem>>, %arg6: memref<64x64xf32, #tpu.memory_space<vmem>>, %arg7: memref<1x64xf32, #tpu.memory_space<vmem>>, %arg8: memref<64x128xf32, #tpu.memory_space<vmem>>, %arg9: memref<1x128xf32, #tpu.memory_space<vmem>>, %arg10: memref<2x128xf32, #tpu.memory_space<vmem>>, %arg11: memref<16x32xf32, #tpu.memory_space<vmem>>) attributes {dimension_semantics = [], scalar_prefetch = 0 : i64, scratch_operands = 1 : i64, tpu.core_type = #tpu.core_type<tc>} {
    %c0 = arith.constant 0 : index
    %c0_0 = arith.constant 0 : index
    %0 = memref.load %arg0[%c0, %c0_0] : memref<2x8xi32, #tpu.memory_space<smem>>
    %1 = arith.index_cast %0 : i32 to index
    %c0_1 = arith.constant 0 : index
    %c0_2 = arith.constant 0 : index
    %2 = vector.load %arg1[%1, %c0_1, %c0_2] : memref<50x1x32xf32, #tpu.memory_space<vmem>>, vector<1x1x32xf32>
    %3 = vector.shape_cast %2 : vector<1x1x32xf32> to vector<1x32xf32>
    %c0_3 = arith.constant 0 : index
    %c0_4 = arith.constant 0 : index
    %4 = vector.load %arg11[%c0_3, %c0_4] : memref<16x32xf32, #tpu.memory_space<vmem>>, vector<1x32xf32>
    tpu.vector_store %arg11[%c0_3, %c0_4], %3 {strides = array<i32>} : memref<16x32xf32, #tpu.memory_space<vmem>>, vector<1x32xf32>,
    %c1 = arith.constant 1 : index
    %c0_5 = arith.constant 0 : index
    %5 = memref.load %arg0[%c1, %c0_5] : memref<2x8xi32, #tpu.memory_space<smem>>
    %6 = arith.index_cast %5 : i32 to index
    %c0_6 = arith.constant 0 : index
    %c0_7 = arith.constant 0 : index
    %7 = vector.load %arg1[%6, %c0_6, %c0_7] : memref<50x1x32xf32, #tpu.memory_space<vmem>>, vector<1x1x32xf32>
    %8 = vector.shape_cast %7 : vector<1x1x32xf32> to vector<1x32xf32>
    %c1_8 = arith.constant 1 : index
    %c0_9 = arith.constant 0 : index
    %9 = vector.load %arg11[%c1_8, %c0_9] : memref<16x32xf32, #tpu.memory_space<vmem>>, vector<1x32xf32>
    tpu.vector_store %arg11[%c1_8, %c0_9], %8 {strides = array<i32>} : memref<16x32xf32, #tpu.memory_space<vmem>>, vector<1x32xf32>,
    %c0_10 = arith.constant 0 : index
    %c1_11 = arith.constant 1 : index
    %10 = memref.load %arg0[%c0_10, %c1_11] : memref<2x8xi32, #tpu.memory_space<smem>>
    %11 = arith.index_cast %10 : i32 to index
    %c0_12 = arith.constant 0 : index
    %c0_13 = arith.constant 0 : index
    %12 = vector.load %arg1[%11, %c0_12, %c0_13] : memref<50x1x32xf32, #tpu.memory_space<vmem>>, vector<1x1x32xf32>
    %13 = vector.shape_cast %12 : vector<1x1x32xf32> to vector<1x32xf32>
    %c2 = arith.constant 2 : index
    %c0_14 = arith.constant 0 : index
    %14 = vector.load %arg11[%c2, %c0_14] : memref<16x32xf32, #tpu.memory_space<vmem>>, vector<1x32xf32>
    tpu.vector_store %arg11[%c2, %c0_14], %13 {strides = array<i32>} : memref<16x32xf32, #tpu.memory_space<vmem>>, vector<1x32xf32>,
    %c1_15 = arith.constant 1 : index
    %c1_16 = arith.constant 1 : index
    %15 = memref.load %arg0[%c1_15, %c1_16] : memref<2x8xi32, #tpu.memory_space<smem>>
    %16 = arith.index_cast %15 : i32 to index
    %c0_17 = arith.constant 0 : index
    %c0_18 = arith.constant 0 : index
    %17 = vector.load %arg1[%16, %c0_17, %c0_18] : memref<50x1x32xf32, #tpu.memory_space<vmem>>, vector<1x1x32xf32>
    %18 = vector.shape_cast %17 : vector<1x1x32xf32> to vector<1x32xf32>
    %c3 = arith.constant 3 : index
    %c0_19 = arith.constant 0 : index
    %19 = vector.load %arg11[%c3, %c0_19] : memref<16x32xf32, #tpu.memory_space<vmem>>, vector<1x32xf32>
    tpu.vector_store %arg11[%c3, %c0_19], %18 {strides = array<i32>} : memref<16x32xf32, #tpu.memory_space<vmem>>, vector<1x32xf32>,
    %c0_20 = arith.constant 0 : index
    %c2_21 = arith.constant 2 : index
    %20 = memref.load %arg0[%c0_20, %c2_21] : memref<2x8xi32, #tpu.memory_space<smem>>
    %21 = arith.index_cast %20 : i32 to index
    %c0_22 = arith.constant 0 : index
    %c0_23 = arith.constant 0 : index
    %22 = vector.load %arg1[%21, %c0_22, %c0_23] : memref<50x1x32xf32, #tpu.memory_space<vmem>>, vector<1x1x32xf32>
    %23 = vector.shape_cast %22 : vector<1x1x32xf32> to vector<1x32xf32>
    %c4 = arith.constant 4 : index
    %c0_24 = arith.constant 0 : index
    %24 = vector.load %arg11[%c4, %c0_24] : memref<16x32xf32, #tpu.memory_space<vmem>>, vector<1x32xf32>
    tpu.vector_store %arg11[%c4, %c0_24], %23 {strides = array<i32>} : memref<16x32xf32, #tpu.memory_space<vmem>>, vector<1x32xf32>,
    %c1_25 = arith.constant 1 : index
    %c2_26 = arith.constant 2 : index
    %25 = memref.load %arg0[%c1_25, %c2_26] : memref<2x8xi32, #tpu.memory_space<smem>>
    %26 = arith.index_cast %25 : i32 to index
    %c0_27 = arith.constant 0 : index
    %c0_28 = arith.constant 0 : index
    %27 = vector.load %arg1[%26, %c0_27, %c0_28] : memref<50x1x32xf32, #tpu.memory_space<vmem>>, vector<1x1x32xf32>
    %28 = vector.shape_cast %27 : vector<1x1x32xf32> to vector<1x32xf32>
    %c5 = arith.constant 5 : index
    %c0_29 = arith.constant 0 : index
    %29 = vector.load %arg11[%c5, %c0_29] : memref<16x32xf32, #tpu.memory_space<vmem>>, vector<1x32xf32>
    tpu.vector_store %arg11[%c5, %c0_29], %28 {strides = array<i32>} : memref<16x32xf32, #tpu.memory_space<vmem>>, vector<1x32xf32>,
    %c0_30 = arith.constant 0 : index
    %c3_31 = arith.constant 3 : index
    %30 = memref.load %arg0[%c0_30, %c3_31] : memref<2x8xi32, #tpu.memory_space<smem>>
    %31 = arith.index_cast %30 : i32 to index
    %c0_32 = arith.constant 0 : index
    %c0_33 = arith.constant 0 : index
    %32 = vector.load %arg1[%31, %c0_32, %c0_33] : memref<50x1x32xf32, #tpu.memory_space<vmem>>, vector<1x1x32xf32>
    %33 = vector.shape_cast %32 : vector<1x1x32xf32> to vector<1x32xf32>
    %c6 = arith.constant 6 : index
    %c0_34 = arith.constant 0 : index
    %34 = vector.load %arg11[%c6, %c0_34] : memref<16x32xf32, #tpu.memory_space<vmem>>, vector<1x32xf32>
    tpu.vector_store %arg11[%c6, %c0_34], %33 {strides = array<i32>} : memref<16x32xf32, #tpu.memory_space<vmem>>, vector<1x32xf32>,
    %c1_35 = arith.constant 1 : index
    %c3_36 = arith.constant 3 : index
    %35 = memref.load %arg0[%c1_35, %c3_36] : memref<2x8xi32, #tpu.memory_space<smem>>
    %36 = arith.index_cast %35 : i32 to index
    %c0_37 = arith.constant 0 : index
    %c0_38 = arith.constant 0 : index
    %37 = vector.load %arg1[%36, %c0_37, %c0_38] : memref<50x1x32xf32, #tpu.memory_space<vmem>>, vector<1x1x32xf32>
    %38 = vector.shape_cast %37 : vector<1x1x32xf32> to vector<1x32xf32>
    %c7 = arith.constant 7 : index
    %c0_39 = arith.constant 0 : index
    %39 = vector.load %arg11[%c7, %c0_39] : memref<16x32xf32, #tpu.memory_space<vmem>>, vector<1x32xf32>
    tpu.vector_store %arg11[%c7, %c0_39], %38 {strides = array<i32>} : memref<16x32xf32, #tpu.memory_space<vmem>>, vector<1x32xf32>,
    %c0_40 = arith.constant 0 : index
    %c4_41 = arith.constant 4 : index
    %40 = memref.load %arg0[%c0_40, %c4_41] : memref<2x8xi32, #tpu.memory_space<smem>>
    %41 = arith.index_cast %40 : i32 to index
    %c0_42 = arith.constant 0 : index
    %c0_43 = arith.constant 0 : index
    %42 = vector.load %arg1[%41, %c0_42, %c0_43] : memref<50x1x32xf32, #tpu.memory_space<vmem>>, vector<1x1x32xf32>
    %43 = vector.shape_cast %42 : vector<1x1x32xf32> to vector<1x32xf32>
    %c8 = arith.constant 8 : index
    %c0_44 = arith.constant 0 : index
    %44 = vector.load %arg11[%c8, %c0_44] : memref<16x32xf32, #tpu.memory_space<vmem>>, vector<1x32xf32>
    tpu.vector_store %arg11[%c8, %c0_44], %43 {strides = array<i32>} : memref<16x32xf32, #tpu.memory_space<vmem>>, vector<1x32xf32>,
    %c1_45 = arith.constant 1 : index
    %c4_46 = arith.constant 4 : index
    %45 = memref.load %arg0[%c1_45, %c4_46] : memref<2x8xi32, #tpu.memory_space<smem>>
    %46 = arith.index_cast %45 : i32 to index
    %c0_47 = arith.constant 0 : index
    %c0_48 = arith.constant 0 : index
    %47 = vector.load %arg1[%46, %c0_47, %c0_48] : memref<50x1x32xf32, #tpu.memory_space<vmem>>, vector<1x1x32xf32>
    %48 = vector.shape_cast %47 : vector<1x1x32xf32> to vector<1x32xf32>
    %c9 = arith.constant 9 : index
    %c0_49 = arith.constant 0 : index
    %49 = vector.load %arg11[%c9, %c0_49] : memref<16x32xf32, #tpu.memory_space<vmem>>, vector<1x32xf32>
    tpu.vector_store %arg11[%c9, %c0_49], %48 {strides = array<i32>} : memref<16x32xf32, #tpu.memory_space<vmem>>, vector<1x32xf32>,
    %c0_50 = arith.constant 0 : index
    %c5_51 = arith.constant 5 : index
    %50 = memref.load %arg0[%c0_50, %c5_51] : memref<2x8xi32, #tpu.memory_space<smem>>
    %51 = arith.index_cast %50 : i32 to index
    %c0_52 = arith.constant 0 : index
    %c0_53 = arith.constant 0 : index
    %52 = vector.load %arg1[%51, %c0_52, %c0_53] : memref<50x1x32xf32, #tpu.memory_space<vmem>>, vector<1x1x32xf32>
    %53 = vector.shape_cast %52 : vector<1x1x32xf32> to vector<1x32xf32>
    %c10 = arith.constant 10 : index
    %c0_54 = arith.constant 0 : index
    %54 = vector.load %arg11[%c10, %c0_54] : memref<16x32xf32, #tpu.memory_space<vmem>>, vector<1x32xf32>
    tpu.vector_store %arg11[%c10, %c0_54], %53 {strides = array<i32>} : memref<16x32xf32, #tpu.memory_space<vmem>>, vector<1x32xf32>,
    %c1_55 = arith.constant 1 : index
    %c5_56 = arith.constant 5 : index
    %55 = memref.load %arg0[%c1_55, %c5_56] : memref<2x8xi32, #tpu.memory_space<smem>>
    %56 = arith.index_cast %55 : i32 to index
    %c0_57 = arith.constant 0 : index
    %c0_58 = arith.constant 0 : index
    %57 = vector.load %arg1[%56, %c0_57, %c0_58] : memref<50x1x32xf32, #tpu.memory_space<vmem>>, vector<1x1x32xf32>
    %58 = vector.shape_cast %57 : vector<1x1x32xf32> to vector<1x32xf32>
    %c11 = arith.constant 11 : index
    %c0_59 = arith.constant 0 : index
    %59 = vector.load %arg11[%c11, %c0_59] : memref<16x32xf32, #tpu.memory_space<vmem>>, vector<1x32xf32>
    tpu.vector_store %arg11[%c11, %c0_59], %58 {strides = array<i32>} : memref<16x32xf32, #tpu.memory_space<vmem>>, vector<1x32xf32>,
    %c0_60 = arith.constant 0 : index
    %c6_61 = arith.constant 6 : index
    %60 = memref.load %arg0[%c0_60, %c6_61] : memref<2x8xi32, #tpu.memory_space<smem>>
    %61 = arith.index_cast %60 : i32 to index
    %c0_62 = arith.constant 0 : index
    %c0_63 = arith.constant 0 : index
    %62 = vector.load %arg1[%61, %c0_62, %c0_63] : memref<50x1x32xf32, #tpu.memory_space<vmem>>, vector<1x1x32xf32>
    %63 = vector.shape_cast %62 : vector<1x1x32xf32> to vector<1x32xf32>
    %c12 = arith.constant 12 : index
    %c0_64 = arith.constant 0 : index
    %64 = vector.load %arg11[%c12, %c0_64] : memref<16x32xf32, #tpu.memory_space<vmem>>, vector<1x32xf32>
    tpu.vector_store %arg11[%c12, %c0_64], %63 {strides = array<i32>} : memref<16x32xf32, #tpu.memory_space<vmem>>, vector<1x32xf32>,
    %c1_65 = arith.constant 1 : index
    %c6_66 = arith.constant 6 : index
    %65 = memref.load %arg0[%c1_65, %c6_66] : memref<2x8xi32, #tpu.memory_space<smem>>
    %66 = arith.index_cast %65 : i32 to index
    %c0_67 = arith.constant 0 : index
    %c0_68 = arith.constant 0 : index
    %67 = vector.load %arg1[%66, %c0_67, %c0_68] : memref<50x1x32xf32, #tpu.memory_space<vmem>>, vector<1x1x32xf32>
    %68 = vector.shape_cast %67 : vector<1x1x32xf32> to vector<1x32xf32>
    %c13 = arith.constant 13 : index
    %c0_69 = arith.constant 0 : index
    %69 = vector.load %arg11[%c13, %c0_69] : memref<16x32xf32, #tpu.memory_space<vmem>>, vector<1x32xf32>
    tpu.vector_store %arg11[%c13, %c0_69], %68 {strides = array<i32>} : memref<16x32xf32, #tpu.memory_space<vmem>>, vector<1x32xf32>,
    %c0_70 = arith.constant 0 : index
    %c7_71 = arith.constant 7 : index
    %70 = memref.load %arg0[%c0_70, %c7_71] : memref<2x8xi32, #tpu.memory_space<smem>>
    %71 = arith.index_cast %70 : i32 to index
    %c0_72 = arith.constant 0 : index
    %c0_73 = arith.constant 0 : index
    %72 = vector.load %arg1[%71, %c0_72, %c0_73] : memref<50x1x32xf32, #tpu.memory_space<vmem>>, vector<1x1x32xf32>
    %73 = vector.shape_cast %72 : vector<1x1x32xf32> to vector<1x32xf32>
    %c14 = arith.constant 14 : index
    %c0_74 = arith.constant 0 : index
    %74 = vector.load %arg11[%c14, %c0_74] : memref<16x32xf32, #tpu.memory_space<vmem>>, vector<1x32xf32>
    tpu.vector_store %arg11[%c14, %c0_74], %73 {strides = array<i32>} : memref<16x32xf32, #tpu.memory_space<vmem>>, vector<1x32xf32>,
    %c1_75 = arith.constant 1 : index
    %c7_76 = arith.constant 7 : index
    %75 = memref.load %arg0[%c1_75, %c7_76] : memref<2x8xi32, #tpu.memory_space<smem>>
    %76 = arith.index_cast %75 : i32 to index
    %c0_77 = arith.constant 0 : index
    %c0_78 = arith.constant 0 : index
    %77 = vector.load %arg1[%76, %c0_77, %c0_78] : memref<50x1x32xf32, #tpu.memory_space<vmem>>, vector<1x1x32xf32>
    %78 = vector.shape_cast %77 : vector<1x1x32xf32> to vector<1x32xf32>
    %c15 = arith.constant 15 : index
    %c0_79 = arith.constant 0 : index
    %79 = vector.load %arg11[%c15, %c0_79] : memref<16x32xf32, #tpu.memory_space<vmem>>, vector<1x32xf32>
    tpu.vector_store %arg11[%c15, %c0_79], %78 {strides = array<i32>} : memref<16x32xf32, #tpu.memory_space<vmem>>, vector<1x32xf32>,
    %c0_80 = arith.constant 0 : index
    %c0_81 = arith.constant 0 : index
    %80 = vector.load %arg11[%c0_80, %c0_81] : memref<16x32xf32, #tpu.memory_space<vmem>>, vector<16x32xf32>
    %c0_82 = arith.constant 0 : index
    %c0_83 = arith.constant 0 : index
    %81 = vector.load %arg2[%c0_82, %c0_83] : memref<32x256xf32, #tpu.memory_space<vmem>>, vector<32x256xf32>
    %cst = arith.constant dense<0.000000e+00> : vector<16x256xf32>
    %82 = tpu.matmul %80, %81, %cst {dimension_numbers = #tpu.dot_dimension_numbers<[1], [0], [0], [1], [0, 0, 1, 1], [], []>} : vector<16x32xf32>, vector<32x256xf32>, vector<16x256xf32> -> vector<16x256xf32>
    %c0_84 = arith.constant 0 : index
    %c0_85 = arith.constant 0 : index
    %83 = vector.load %arg5[%c0_84, %c0_85] : memref<1x256xf32, #tpu.memory_space<vmem>>, vector<1x256xf32>
    %84 = vector.broadcast %83 : vector<1x256xf32> to vector<16x256xf32>
    %85 = arith.addf %82, %84 : vector<16x256xf32>
    %c0_86 = arith.constant 0 : index
    %c0_87 = arith.constant 0 : index
    %86 = vector.load %arg3[%c0_86, %c0_87] : memref<32x256xf32, #tpu.memory_space<vmem>>, vector<32x256xf32>
    %cst_88 = arith.constant dense<0.000000e+00> : vector<16x256xf32>
    %87 = tpu.matmul %80, %86, %cst_88 {dimension_numbers = #tpu.dot_dimension_numbers<[1], [0], [0], [1], [0, 0, 1, 1], [], []>} : vector<16x32xf32>, vector<32x256xf32>, vector<16x256xf32> -> vector<16x256xf32>
    %c0_89 = arith.constant 0 : index
    %c0_90 = arith.constant 0 : index
    %88 = vector.load %arg4[%c0_89, %c0_90] : memref<64x256xf32, #tpu.memory_space<vmem>>, vector<64x256xf32>
    %cst_91 = arith.constant 0.000000e+00 : f32
    %89 = vector.broadcast %cst_91 : f32 to vector<2x64xf32>
    %cst_92 = arith.constant 0.000000e+00 : f32
    %90 = vector.broadcast %cst_92 : f32 to vector<2x64xf32>
    %91 = vector.extract_strided_slice %85 {offsets = [0, 0], sizes = [2, 256], strides = [1, 1]} : vector<16x256xf32> to vector<2x256xf32>
    %92 = vector.extract_strided_slice %87 {offsets = [14, 0], sizes = [2, 256], strides = [1, 1]} : vector<16x256xf32> to vector<2x256xf32>
    %93 = arith.addf %91, %92 : vector<2x256xf32>
    %cst_93 = arith.constant dense<0.000000e+00> : vector<2x256xf32>
    %94 = tpu.matmul %89, %88, %cst_93 {dimension_numbers = #tpu.dot_dimension_numbers<[1], [0], [0], [1], [0, 0, 1, 1], [], []>} : vector<2x64xf32>, vector<64x256xf32>, vector<2x256xf32> -> vector<2x256xf32>
    %95 = arith.addf %93, %94 : vector<2x256xf32>
    %96 = vector.extract_strided_slice %95 {offsets = [0, 0], sizes = [2, 64], strides = [1, 1]} : vector<2x256xf32> to vector<2x64xf32>
    %cst_94 = arith.constant 0.000000e+00 : f32
    %97 = vector.broadcast %cst_94 : f32 to vector<2x64xf32>
    %98 = arith.subf %97, %96 : vector<2x64xf32>
    %99 = math.exp %98 : vector<2x64xf32>
    %cst_95 = arith.constant 1.000000e+00 : f32
    %100 = vector.broadcast %cst_95 : f32 to vector<2x64xf32>
    %101 = arith.addf %100, %99 : vector<2x64xf32>
    %102 = tpu.reciprocal %101 {approx = true} : vector<2x64xf32> -> vector<2x64xf32>
    %103 = vector.extract_strided_slice %95 {offsets = [0, 64], sizes = [2, 64], strides = [1, 1]} : vector<2x256xf32> to vector<2x64xf32>
    %cst_96 = arith.constant 0.000000e+00 : f32
    %104 = vector.broadcast %cst_96 : f32 to vector<2x64xf32>
    %105 = arith.subf %104, %103 : vector<2x64xf32>
    %106 = math.exp %105 : vector<2x64xf32>
    %cst_97 = arith.constant 1.000000e+00 : f32
    %107 = vector.broadcast %cst_97 : f32 to vector<2x64xf32>
    %108 = arith.addf %107, %106 : vector<2x64xf32>
    %109 = tpu.reciprocal %108 {approx = true} : vector<2x64xf32> -> vector<2x64xf32>
    %110 = vector.extract_strided_slice %95 {offsets = [0, 128], sizes = [2, 64], strides = [1, 1]} : vector<2x256xf32> to vector<2x64xf32>
    %111 = math.tanh %110 : vector<2x64xf32>
    %112 = vector.extract_strided_slice %95 {offsets = [0, 192], sizes = [2, 64], strides = [1, 1]} : vector<2x256xf32> to vector<2x64xf32>
    %cst_98 = arith.constant 0.000000e+00 : f32
    %113 = vector.broadcast %cst_98 : f32 to vector<2x64xf32>
    %114 = arith.subf %113, %112 : vector<2x64xf32>
    %115 = math.exp %114 : vector<2x64xf32>
    %cst_99 = arith.constant 1.000000e+00 : f32
    %116 = vector.broadcast %cst_99 : f32 to vector<2x64xf32>
    %117 = arith.addf %116, %115 : vector<2x64xf32>
    %118 = tpu.reciprocal %117 {approx = true} : vector<2x64xf32> -> vector<2x64xf32>
    %119 = arith.mulf %109, %90 : vector<2x64xf32>
    %120 = arith.mulf %102, %111 : vector<2x64xf32>
    %121 = arith.addf %119, %120 : vector<2x64xf32>
    %122 = math.tanh %121 : vector<2x64xf32>
    %123 = arith.mulf %118, %122 : vector<2x64xf32>
    %124 = vector.extract_strided_slice %85 {offsets = [2, 0], sizes = [2, 256], strides = [1, 1]} : vector<16x256xf32> to vector<2x256xf32>
    %125 = vector.extract_strided_slice %87 {offsets = [12, 0], sizes = [2, 256], strides = [1, 1]} : vector<16x256xf32> to vector<2x256xf32>
    %126 = arith.addf %124, %125 : vector<2x256xf32>
    %cst_100 = arith.constant dense<0.000000e+00> : vector<2x256xf32>
    %127 = tpu.matmul %123, %88, %cst_100 {dimension_numbers = #tpu.dot_dimension_numbers<[1], [0], [0], [1], [0, 0, 1, 1], [], []>} : vector<2x64xf32>, vector<64x256xf32>, vector<2x256xf32> -> vector<2x256xf32>
    %128 = arith.addf %126, %127 : vector<2x256xf32>
    %129 = vector.extract_strided_slice %128 {offsets = [0, 0], sizes = [2, 64], strides = [1, 1]} : vector<2x256xf32> to vector<2x64xf32>
    %cst_101 = arith.constant 0.000000e+00 : f32
    %130 = vector.broadcast %cst_101 : f32 to vector<2x64xf32>
    %131 = arith.subf %130, %129 : vector<2x64xf32>
    %132 = math.exp %131 : vector<2x64xf32>
    %cst_102 = arith.constant 1.000000e+00 : f32
    %133 = vector.broadcast %cst_102 : f32 to vector<2x64xf32>
    %134 = arith.addf %133, %132 : vector<2x64xf32>
    %135 = tpu.reciprocal %134 {approx = true} : vector<2x64xf32> -> vector<2x64xf32>
    %136 = vector.extract_strided_slice %128 {offsets = [0, 64], sizes = [2, 64], strides = [1, 1]} : vector<2x256xf32> to vector<2x64xf32>
    %cst_103 = arith.constant 0.000000e+00 : f32
    %137 = vector.broadcast %cst_103 : f32 to vector<2x64xf32>
    %138 = arith.subf %137, %136 : vector<2x64xf32>
    %139 = math.exp %138 : vector<2x64xf32>
    %cst_104 = arith.constant 1.000000e+00 : f32
    %140 = vector.broadcast %cst_104 : f32 to vector<2x64xf32>
    %141 = arith.addf %140, %139 : vector<2x64xf32>
    %142 = tpu.reciprocal %141 {approx = true} : vector<2x64xf32> -> vector<2x64xf32>
    %143 = vector.extract_strided_slice %128 {offsets = [0, 128], sizes = [2, 64], strides = [1, 1]} : vector<2x256xf32> to vector<2x64xf32>
    %144 = math.tanh %143 : vector<2x64xf32>
    %145 = vector.extract_strided_slice %128 {offsets = [0, 192], sizes = [2, 64], strides = [1, 1]} : vector<2x256xf32> to vector<2x64xf32>
    %cst_105 = arith.constant 0.000000e+00 : f32
    %146 = vector.broadcast %cst_105 : f32 to vector<2x64xf32>
    %147 = arith.subf %146, %145 : vector<2x64xf32>
    %148 = math.exp %147 : vector<2x64xf32>
    %cst_106 = arith.constant 1.000000e+00 : f32
    %149 = vector.broadcast %cst_106 : f32 to vector<2x64xf32>
    %150 = arith.addf %149, %148 : vector<2x64xf32>
    %151 = tpu.reciprocal %150 {approx = true} : vector<2x64xf32> -> vector<2x64xf32>
    %152 = arith.mulf %142, %121 : vector<2x64xf32>
    %153 = arith.mulf %135, %144 : vector<2x64xf32>
    %154 = arith.addf %152, %153 : vector<2x64xf32>
    %155 = math.tanh %154 : vector<2x64xf32>
    %156 = arith.mulf %151, %155 : vector<2x64xf32>
    %157 = vector.extract_strided_slice %85 {offsets = [4, 0], sizes = [2, 256], strides = [1, 1]} : vector<16x256xf32> to vector<2x256xf32>
    %158 = vector.extract_strided_slice %87 {offsets = [10, 0], sizes = [2, 256], strides = [1, 1]} : vector<16x256xf32> to vector<2x256xf32>
    %159 = arith.addf %157, %158 : vector<2x256xf32>
    %cst_107 = arith.constant dense<0.000000e+00> : vector<2x256xf32>
    %160 = tpu.matmul %156, %88, %cst_107 {dimension_numbers = #tpu.dot_dimension_numbers<[1], [0], [0], [1], [0, 0, 1, 1], [], []>} : vector<2x64xf32>, vector<64x256xf32>, vector<2x256xf32> -> vector<2x256xf32>
    %161 = arith.addf %159, %160 : vector<2x256xf32>
    %162 = vector.extract_strided_slice %161 {offsets = [0, 0], sizes = [2, 64], strides = [1, 1]} : vector<2x256xf32> to vector<2x64xf32>
    %cst_108 = arith.constant 0.000000e+00 : f32
    %163 = vector.broadcast %cst_108 : f32 to vector<2x64xf32>
    %164 = arith.subf %163, %162 : vector<2x64xf32>
    %165 = math.exp %164 : vector<2x64xf32>
    %cst_109 = arith.constant 1.000000e+00 : f32
    %166 = vector.broadcast %cst_109 : f32 to vector<2x64xf32>
    %167 = arith.addf %166, %165 : vector<2x64xf32>
    %168 = tpu.reciprocal %167 {approx = true} : vector<2x64xf32> -> vector<2x64xf32>
    %169 = vector.extract_strided_slice %161 {offsets = [0, 64], sizes = [2, 64], strides = [1, 1]} : vector<2x256xf32> to vector<2x64xf32>
    %cst_110 = arith.constant 0.000000e+00 : f32
    %170 = vector.broadcast %cst_110 : f32 to vector<2x64xf32>
    %171 = arith.subf %170, %169 : vector<2x64xf32>
    %172 = math.exp %171 : vector<2x64xf32>
    %cst_111 = arith.constant 1.000000e+00 : f32
    %173 = vector.broadcast %cst_111 : f32 to vector<2x64xf32>
    %174 = arith.addf %173, %172 : vector<2x64xf32>
    %175 = tpu.reciprocal %174 {approx = true} : vector<2x64xf32> -> vector<2x64xf32>
    %176 = vector.extract_strided_slice %161 {offsets = [0, 128], sizes = [2, 64], strides = [1, 1]} : vector<2x256xf32> to vector<2x64xf32>
    %177 = math.tanh %176 : vector<2x64xf32>
    %178 = vector.extract_strided_slice %161 {offsets = [0, 192], sizes = [2, 64], strides = [1, 1]} : vector<2x256xf32> to vector<2x64xf32>
    %cst_112 = arith.constant 0.000000e+00 : f32
    %179 = vector.broadcast %cst_112 : f32 to vector<2x64xf32>
    %180 = arith.subf %179, %178 : vector<2x64xf32>
    %181 = math.exp %180 : vector<2x64xf32>
    %cst_113 = arith.constant 1.000000e+00 : f32
    %182 = vector.broadcast %cst_113 : f32 to vector<2x64xf32>
    %183 = arith.addf %182, %181 : vector<2x64xf32>
    %184 = tpu.reciprocal %183 {approx = true} : vector<2x64xf32> -> vector<2x64xf32>
    %185 = arith.mulf %175, %154 : vector<2x64xf32>
    %186 = arith.mulf %168, %177 : vector<2x64xf32>
    %187 = arith.addf %185, %186 : vector<2x64xf32>
    %188 = math.tanh %187 : vector<2x64xf32>
    %189 = arith.mulf %184, %188 : vector<2x64xf32>
    %190 = vector.extract_strided_slice %85 {offsets = [6, 0], sizes = [2, 256], strides = [1, 1]} : vector<16x256xf32> to vector<2x256xf32>
    %191 = vector.extract_strided_slice %87 {offsets = [8, 0], sizes = [2, 256], strides = [1, 1]} : vector<16x256xf32> to vector<2x256xf32>
    %192 = arith.addf %190, %191 : vector<2x256xf32>
    %cst_114 = arith.constant dense<0.000000e+00> : vector<2x256xf32>
    %193 = tpu.matmul %189, %88, %cst_114 {dimension_numbers = #tpu.dot_dimension_numbers<[1], [0], [0], [1], [0, 0, 1, 1], [], []>} : vector<2x64xf32>, vector<64x256xf32>, vector<2x256xf32> -> vector<2x256xf32>
    %194 = arith.addf %192, %193 : vector<2x256xf32>
    %195 = vector.extract_strided_slice %194 {offsets = [0, 0], sizes = [2, 64], strides = [1, 1]} : vector<2x256xf32> to vector<2x64xf32>
    %cst_115 = arith.constant 0.000000e+00 : f32
    %196 = vector.broadcast %cst_115 : f32 to vector<2x64xf32>
    %197 = arith.subf %196, %195 : vector<2x64xf32>
    %198 = math.exp %197 : vector<2x64xf32>
    %cst_116 = arith.constant 1.000000e+00 : f32
    %199 = vector.broadcast %cst_116 : f32 to vector<2x64xf32>
    %200 = arith.addf %199, %198 : vector<2x64xf32>
    %201 = tpu.reciprocal %200 {approx = true} : vector<2x64xf32> -> vector<2x64xf32>
    %202 = vector.extract_strided_slice %194 {offsets = [0, 64], sizes = [2, 64], strides = [1, 1]} : vector<2x256xf32> to vector<2x64xf32>
    %cst_117 = arith.constant 0.000000e+00 : f32
    %203 = vector.broadcast %cst_117 : f32 to vector<2x64xf32>
    %204 = arith.subf %203, %202 : vector<2x64xf32>
    %205 = math.exp %204 : vector<2x64xf32>
    %cst_118 = arith.constant 1.000000e+00 : f32
    %206 = vector.broadcast %cst_118 : f32 to vector<2x64xf32>
    %207 = arith.addf %206, %205 : vector<2x64xf32>
    %208 = tpu.reciprocal %207 {approx = true} : vector<2x64xf32> -> vector<2x64xf32>
    %209 = vector.extract_strided_slice %194 {offsets = [0, 128], sizes = [2, 64], strides = [1, 1]} : vector<2x256xf32> to vector<2x64xf32>
    %210 = math.tanh %209 : vector<2x64xf32>
    %211 = vector.extract_strided_slice %194 {offsets = [0, 192], sizes = [2, 64], strides = [1, 1]} : vector<2x256xf32> to vector<2x64xf32>
    %cst_119 = arith.constant 0.000000e+00 : f32
    %212 = vector.broadcast %cst_119 : f32 to vector<2x64xf32>
    %213 = arith.subf %212, %211 : vector<2x64xf32>
    %214 = math.exp %213 : vector<2x64xf32>
    %cst_120 = arith.constant 1.000000e+00 : f32
    %215 = vector.broadcast %cst_120 : f32 to vector<2x64xf32>
    %216 = arith.addf %215, %214 : vector<2x64xf32>
    %217 = tpu.reciprocal %216 {approx = true} : vector<2x64xf32> -> vector<2x64xf32>
    %218 = arith.mulf %208, %187 : vector<2x64xf32>
    %219 = arith.mulf %201, %210 : vector<2x64xf32>
    %220 = arith.addf %218, %219 : vector<2x64xf32>
    %221 = math.tanh %220 : vector<2x64xf32>
    %222 = arith.mulf %217, %221 : vector<2x64xf32>
    %223 = vector.extract_strided_slice %85 {offsets = [8, 0], sizes = [2, 256], strides = [1, 1]} : vector<16x256xf32> to vector<2x256xf32>
    %224 = vector.extract_strided_slice %87 {offsets = [6, 0], sizes = [2, 256], strides = [1, 1]} : vector<16x256xf32> to vector<2x256xf32>
    %225 = arith.addf %223, %224 : vector<2x256xf32>
    %cst_121 = arith.constant dense<0.000000e+00> : vector<2x256xf32>
    %226 = tpu.matmul %222, %88, %cst_121 {dimension_numbers = #tpu.dot_dimension_numbers<[1], [0], [0], [1], [0, 0, 1, 1], [], []>} : vector<2x64xf32>, vector<64x256xf32>, vector<2x256xf32> -> vector<2x256xf32>
    %227 = arith.addf %225, %226 : vector<2x256xf32>
    %228 = vector.extract_strided_slice %227 {offsets = [0, 0], sizes = [2, 64], strides = [1, 1]} : vector<2x256xf32> to vector<2x64xf32>
    %cst_122 = arith.constant 0.000000e+00 : f32
    %229 = vector.broadcast %cst_122 : f32 to vector<2x64xf32>
    %230 = arith.subf %229, %228 : vector<2x64xf32>
    %231 = math.exp %230 : vector<2x64xf32>
    %cst_123 = arith.constant 1.000000e+00 : f32
    %232 = vector.broadcast %cst_123 : f32 to vector<2x64xf32>
    %233 = arith.addf %232, %231 : vector<2x64xf32>
    %234 = tpu.reciprocal %233 {approx = true} : vector<2x64xf32> -> vector<2x64xf32>
    %235 = vector.extract_strided_slice %227 {offsets = [0, 64], sizes = [2, 64], strides = [1, 1]} : vector<2x256xf32> to vector<2x64xf32>
    %cst_124 = arith.constant 0.000000e+00 : f32
    %236 = vector.broadcast %cst_124 : f32 to vector<2x64xf32>
    %237 = arith.subf %236, %235 : vector<2x64xf32>
    %238 = math.exp %237 : vector<2x64xf32>
    %cst_125 = arith.constant 1.000000e+00 : f32
    %239 = vector.broadcast %cst_125 : f32 to vector<2x64xf32>
    %240 = arith.addf %239, %238 : vector<2x64xf32>
    %241 = tpu.reciprocal %240 {approx = true} : vector<2x64xf32> -> vector<2x64xf32>
    %242 = vector.extract_strided_slice %227 {offsets = [0, 128], sizes = [2, 64], strides = [1, 1]} : vector<2x256xf32> to vector<2x64xf32>
    %243 = math.tanh %242 : vector<2x64xf32>
    %244 = vector.extract_strided_slice %227 {offsets = [0, 192], sizes = [2, 64], strides = [1, 1]} : vector<2x256xf32> to vector<2x64xf32>
    %cst_126 = arith.constant 0.000000e+00 : f32
    %245 = vector.broadcast %cst_126 : f32 to vector<2x64xf32>
    %246 = arith.subf %245, %244 : vector<2x64xf32>
    %247 = math.exp %246 : vector<2x64xf32>
    %cst_127 = arith.constant 1.000000e+00 : f32
    %248 = vector.broadcast %cst_127 : f32 to vector<2x64xf32>
    %249 = arith.addf %248, %247 : vector<2x64xf32>
    %250 = tpu.reciprocal %249 {approx = true} : vector<2x64xf32> -> vector<2x64xf32>
    %251 = arith.mulf %241, %220 : vector<2x64xf32>
    %252 = arith.mulf %234, %243 : vector<2x64xf32>
    %253 = arith.addf %251, %252 : vector<2x64xf32>
    %254 = math.tanh %253 : vector<2x64xf32>
    %255 = arith.mulf %250, %254 : vector<2x64xf32>
    %256 = vector.extract_strided_slice %85 {offsets = [10, 0], sizes = [2, 256], strides = [1, 1]} : vector<16x256xf32> to vector<2x256xf32>
    %257 = vector.extract_strided_slice %87 {offsets = [4, 0], sizes = [2, 256], strides = [1, 1]} : vector<16x256xf32> to vector<2x256xf32>
    %258 = arith.addf %256, %257 : vector<2x256xf32>
    %cst_128 = arith.constant dense<0.000000e+00> : vector<2x256xf32>
    %259 = tpu.matmul %255, %88, %cst_128 {dimension_numbers = #tpu.dot_dimension_numbers<[1], [0], [0], [1], [0, 0, 1, 1], [], []>} : vector<2x64xf32>, vector<64x256xf32>, vector<2x256xf32> -> vector<2x256xf32>
    %260 = arith.addf %258, %259 : vector<2x256xf32>
    %261 = vector.extract_strided_slice %260 {offsets = [0, 0], sizes = [2, 64], strides = [1, 1]} : vector<2x256xf32> to vector<2x64xf32>
    %cst_129 = arith.constant 0.000000e+00 : f32
    %262 = vector.broadcast %cst_129 : f32 to vector<2x64xf32>
    %263 = arith.subf %262, %261 : vector<2x64xf32>
    %264 = math.exp %263 : vector<2x64xf32>
    %cst_130 = arith.constant 1.000000e+00 : f32
    %265 = vector.broadcast %cst_130 : f32 to vector<2x64xf32>
    %266 = arith.addf %265, %264 : vector<2x64xf32>
    %267 = tpu.reciprocal %266 {approx = true} : vector<2x64xf32> -> vector<2x64xf32>
    %268 = vector.extract_strided_slice %260 {offsets = [0, 64], sizes = [2, 64], strides = [1, 1]} : vector<2x256xf32> to vector<2x64xf32>
    %cst_131 = arith.constant 0.000000e+00 : f32
    %269 = vector.broadcast %cst_131 : f32 to vector<2x64xf32>
    %270 = arith.subf %269, %268 : vector<2x64xf32>
    %271 = math.exp %270 : vector<2x64xf32>
    %cst_132 = arith.constant 1.000000e+00 : f32
    %272 = vector.broadcast %cst_132 : f32 to vector<2x64xf32>
    %273 = arith.addf %272, %271 : vector<2x64xf32>
    %274 = tpu.reciprocal %273 {approx = true} : vector<2x64xf32> -> vector<2x64xf32>
    %275 = vector.extract_strided_slice %260 {offsets = [0, 128], sizes = [2, 64], strides = [1, 1]} : vector<2x256xf32> to vector<2x64xf32>
    %276 = math.tanh %275 : vector<2x64xf32>
    %277 = vector.extract_strided_slice %260 {offsets = [0, 192], sizes = [2, 64], strides = [1, 1]} : vector<2x256xf32> to vector<2x64xf32>
    %cst_133 = arith.constant 0.000000e+00 : f32
    %278 = vector.broadcast %cst_133 : f32 to vector<2x64xf32>
    %279 = arith.subf %278, %277 : vector<2x64xf32>
    %280 = math.exp %279 : vector<2x64xf32>
    %cst_134 = arith.constant 1.000000e+00 : f32
    %281 = vector.broadcast %cst_134 : f32 to vector<2x64xf32>
    %282 = arith.addf %281, %280 : vector<2x64xf32>
    %283 = tpu.reciprocal %282 {approx = true} : vector<2x64xf32> -> vector<2x64xf32>
    %284 = arith.mulf %274, %253 : vector<2x64xf32>
    %285 = arith.mulf %267, %276 : vector<2x64xf32>
    %286 = arith.addf %284, %285 : vector<2x64xf32>
    %287 = math.tanh %286 : vector<2x64xf32>
    %288 = arith.mulf %283, %287 : vector<2x64xf32>
    %289 = vector.extract_strided_slice %85 {offsets = [12, 0], sizes = [2, 256], strides = [1, 1]} : vector<16x256xf32> to vector<2x256xf32>
    %290 = vector.extract_strided_slice %87 {offsets = [2, 0], sizes = [2, 256], strides = [1, 1]} : vector<16x256xf32> to vector<2x256xf32>
    %291 = arith.addf %289, %290 : vector<2x256xf32>
    %cst_135 = arith.constant dense<0.000000e+00> : vector<2x256xf32>
    %292 = tpu.matmul %288, %88, %cst_135 {dimension_numbers = #tpu.dot_dimension_numbers<[1], [0], [0], [1], [0, 0, 1, 1], [], []>} : vector<2x64xf32>, vector<64x256xf32>, vector<2x256xf32> -> vector<2x256xf32>
    %293 = arith.addf %291, %292 : vector<2x256xf32>
    %294 = vector.extract_strided_slice %293 {offsets = [0, 0], sizes = [2, 64], strides = [1, 1]} : vector<2x256xf32> to vector<2x64xf32>
    %cst_136 = arith.constant 0.000000e+00 : f32
    %295 = vector.broadcast %cst_136 : f32 to vector<2x64xf32>
    %296 = arith.subf %295, %294 : vector<2x64xf32>
    %297 = math.exp %296 : vector<2x64xf32>
    %cst_137 = arith.constant 1.000000e+00 : f32
    %298 = vector.broadcast %cst_137 : f32 to vector<2x64xf32>
    %299 = arith.addf %298, %297 : vector<2x64xf32>
    %300 = tpu.reciprocal %299 {approx = true} : vector<2x64xf32> -> vector<2x64xf32>
    %301 = vector.extract_strided_slice %293 {offsets = [0, 64], sizes = [2, 64], strides = [1, 1]} : vector<2x256xf32> to vector<2x64xf32>
    %cst_138 = arith.constant 0.000000e+00 : f32
    %302 = vector.broadcast %cst_138 : f32 to vector<2x64xf32>
    %303 = arith.subf %302, %301 : vector<2x64xf32>
    %304 = math.exp %303 : vector<2x64xf32>
    %cst_139 = arith.constant 1.000000e+00 : f32
    %305 = vector.broadcast %cst_139 : f32 to vector<2x64xf32>
    %306 = arith.addf %305, %304 : vector<2x64xf32>
    %307 = tpu.reciprocal %306 {approx = true} : vector<2x64xf32> -> vector<2x64xf32>
    %308 = vector.extract_strided_slice %293 {offsets = [0, 128], sizes = [2, 64], strides = [1, 1]} : vector<2x256xf32> to vector<2x64xf32>
    %309 = math.tanh %308 : vector<2x64xf32>
    %310 = vector.extract_strided_slice %293 {offsets = [0, 192], sizes = [2, 64], strides = [1, 1]} : vector<2x256xf32> to vector<2x64xf32>
    %cst_140 = arith.constant 0.000000e+00 : f32
    %311 = vector.broadcast %cst_140 : f32 to vector<2x64xf32>
    %312 = arith.subf %311, %310 : vector<2x64xf32>
    %313 = math.exp %312 : vector<2x64xf32>
    %cst_141 = arith.constant 1.000000e+00 : f32
    %314 = vector.broadcast %cst_141 : f32 to vector<2x64xf32>
    %315 = arith.addf %314, %313 : vector<2x64xf32>
    %316 = tpu.reciprocal %315 {approx = true} : vector<2x64xf32> -> vector<2x64xf32>
    %317 = arith.mulf %307, %286 : vector<2x64xf32>
    %318 = arith.mulf %300, %309 : vector<2x64xf32>
    %319 = arith.addf %317, %318 : vector<2x64xf32>
    %320 = math.tanh %319 : vector<2x64xf32>
    %321 = arith.mulf %316, %320 : vector<2x64xf32>
    %322 = vector.extract_strided_slice %85 {offsets = [14, 0], sizes = [2, 256], strides = [1, 1]} : vector<16x256xf32> to vector<2x256xf32>
    %323 = vector.extract_strided_slice %87 {offsets = [0, 0], sizes = [2, 256], strides = [1, 1]} : vector<16x256xf32> to vector<2x256xf32>
    %324 = arith.addf %322, %323 : vector<2x256xf32>
    %cst_142 = arith.constant dense<0.000000e+00> : vector<2x256xf32>
    %325 = tpu.matmul %321, %88, %cst_142 {dimension_numbers = #tpu.dot_dimension_numbers<[1], [0], [0], [1], [0, 0, 1, 1], [], []>} : vector<2x64xf32>, vector<64x256xf32>, vector<2x256xf32> -> vector<2x256xf32>
    %326 = arith.addf %324, %325 : vector<2x256xf32>
    %327 = vector.extract_strided_slice %326 {offsets = [0, 0], sizes = [2, 64], strides = [1, 1]} : vector<2x256xf32> to vector<2x64xf32>
    %cst_143 = arith.constant 0.000000e+00 : f32
    %328 = vector.broadcast %cst_143 : f32 to vector<2x64xf32>
    %329 = arith.subf %328, %327 : vector<2x64xf32>
    %330 = math.exp %329 : vector<2x64xf32>
    %cst_144 = arith.constant 1.000000e+00 : f32
    %331 = vector.broadcast %cst_144 : f32 to vector<2x64xf32>
    %332 = arith.addf %331, %330 : vector<2x64xf32>
    %333 = tpu.reciprocal %332 {approx = true} : vector<2x64xf32> -> vector<2x64xf32>
    %334 = vector.extract_strided_slice %326 {offsets = [0, 64], sizes = [2, 64], strides = [1, 1]} : vector<2x256xf32> to vector<2x64xf32>
    %cst_145 = arith.constant 0.000000e+00 : f32
    %335 = vector.broadcast %cst_145 : f32 to vector<2x64xf32>
    %336 = arith.subf %335, %334 : vector<2x64xf32>
    %337 = math.exp %336 : vector<2x64xf32>
    %cst_146 = arith.constant 1.000000e+00 : f32
    %338 = vector.broadcast %cst_146 : f32 to vector<2x64xf32>
    %339 = arith.addf %338, %337 : vector<2x64xf32>
    %340 = tpu.reciprocal %339 {approx = true} : vector<2x64xf32> -> vector<2x64xf32>
    %341 = vector.extract_strided_slice %326 {offsets = [0, 128], sizes = [2, 64], strides = [1, 1]} : vector<2x256xf32> to vector<2x64xf32>
    %342 = math.tanh %341 : vector<2x64xf32>
    %343 = vector.extract_strided_slice %326 {offsets = [0, 192], sizes = [2, 64], strides = [1, 1]} : vector<2x256xf32> to vector<2x64xf32>
    %cst_147 = arith.constant 0.000000e+00 : f32
    %344 = vector.broadcast %cst_147 : f32 to vector<2x64xf32>
    %345 = arith.subf %344, %343 : vector<2x64xf32>
    %346 = math.exp %345 : vector<2x64xf32>
    %cst_148 = arith.constant 1.000000e+00 : f32
    %347 = vector.broadcast %cst_148 : f32 to vector<2x64xf32>
    %348 = arith.addf %347, %346 : vector<2x64xf32>
    %349 = tpu.reciprocal %348 {approx = true} : vector<2x64xf32> -> vector<2x64xf32>
    %350 = arith.mulf %340, %319 : vector<2x64xf32>
    %351 = arith.mulf %333, %342 : vector<2x64xf32>
    %352 = arith.addf %350, %351 : vector<2x64xf32>
    %353 = math.tanh %352 : vector<2x64xf32>
    %354 = arith.mulf %349, %353 : vector<2x64xf32>
    %c0_149 = arith.constant 0 : index
    %c0_150 = arith.constant 0 : index
    %355 = vector.load %arg6[%c0_149, %c0_150] : memref<64x64xf32, #tpu.memory_space<vmem>>, vector<64x64xf32>
    %cst_151 = arith.constant dense<0.000000e+00> : vector<2x64xf32>
    %356 = tpu.matmul %354, %355, %cst_151 {dimension_numbers = #tpu.dot_dimension_numbers<[1], [0], [0], [1], [0, 0, 1, 1], [], []>} : vector<2x64xf32>, vector<64x64xf32>, vector<2x64xf32> -> vector<2x64xf32>
    %c0_152 = arith.constant 0 : index
    %c0_153 = arith.constant 0 : index
    %357 = vector.load %arg7[%c0_152, %c0_153] : memref<1x64xf32, #tpu.memory_space<vmem>>, vector<1x64xf32>
    %358 = vector.broadcast %357 : vector<1x64xf32> to vector<2x64xf32>
    %359 = arith.addf %356, %358 : vector<2x64xf32>
    %cst_154 = arith.constant 0.000000e+00 : f32
    %360 = vector.broadcast %cst_154 : f32 to vector<2x64xf32>
    %361 = arith.maximumf %359, %360 : vector<2x64xf32>
    %c0_155 = arith.constant 0 : index
    %c0_156 = arith.constant 0 : index
    %362 = vector.load %arg8[%c0_155, %c0_156] : memref<64x128xf32, #tpu.memory_space<vmem>>, vector<64x128xf32>
    %cst_157 = arith.constant dense<0.000000e+00> : vector<2x128xf32>
    %363 = tpu.matmul %361, %362, %cst_157 {dimension_numbers = #tpu.dot_dimension_numbers<[1], [0], [0], [1], [0, 0, 1, 1], [], []>} : vector<2x64xf32>, vector<64x128xf32>, vector<2x128xf32> -> vector<2x128xf32>
    %c0_158 = arith.constant 0 : index
    %c0_159 = arith.constant 0 : index
    %364 = vector.load %arg9[%c0_158, %c0_159] : memref<1x128xf32, #tpu.memory_space<vmem>>, vector<1x128xf32>
    %365 = vector.broadcast %364 : vector<1x128xf32> to vector<2x128xf32>
    %366 = arith.addf %363, %365 : vector<2x128xf32>
    %cst_160 = arith.constant 0.000000e+00 : f32
    %367 = vector.broadcast %cst_160 : f32 to vector<2x128xf32>
    %368 = arith.subf %367, %366 : vector<2x128xf32>
    %369 = math.exp %368 : vector<2x128xf32>
    %cst_161 = arith.constant 1.000000e+00 : f32
    %370 = vector.broadcast %cst_161 : f32 to vector<2x128xf32>
    %371 = arith.addf %370, %369 : vector<2x128xf32>
    %372 = tpu.reciprocal %371 {approx = true} : vector<2x128xf32> -> vector<2x128xf32>
    %c0_162 = arith.constant 0 : index
    %c0_163 = arith.constant 0 : index
    %373 = vector.load %arg10[%c0_162, %c0_163] : memref<2x128xf32, #tpu.memory_space<vmem>>, vector<2x128xf32>
    tpu.vector_store %arg10[%c0_162, %c0_163], %372 {strides = array<i32>} : memref<2x128xf32, #tpu.memory_space<vmem>>, vector<2x128xf32>,
    return
  }
}

</mosaic_0001>

<llo_original>
// kernel: tpu_custom_call.1
$region0: #{tpu_custom_call.1}
  #allocation0 [shape = 'u32[]', space=smem, size = 0x4, offset = 0x4, fixed_abs, tag = 'smem constant byte address 0x4 - core index']
  #allocation1 [shape = 'u32[144,128]{1,0:T(1,128)}', space=vmem, size = 0x12000, scoped, tag = 'internal scratch']
  #allocation2 [shape = 'f32[16,32]{1,0:T(8,128)}', space=vmem, size = 0x2000, scoped, tag = 'scratch operand']
  %s0 = inlined_call_operand.vmem [shape: s32[2,8], index: 0, kind: input, shape index: {}]
  %s1 = inlined_call_operand.vmem [shape: f32[50,1,32], index: 1, kind: input, shape index: {}]
  %s2 = inlined_call_operand.vmem [shape: f32[32,256], index: 2, kind: input, shape index: {}]
  %s3 = inlined_call_operand.hbm [shape: f32[32,256], index: 3, kind: input, shape index: {}]
  %s4 = inlined_call_operand.hbm [shape: f32[64,256], index: 4, kind: input, shape index: {}]
  %s5 = inlined_call_operand.vmem [shape: f32[1,256], index: 5, kind: input, shape index: {}]
  %s6 = inlined_call_operand.hbm [shape: f32[64,64], index: 6, kind: input, shape index: {}]
  %s7 = inlined_call_operand.vmem [shape: f32[1,64], index: 7, kind: input, shape index: {}]
  %s8 = inlined_call_operand.hbm [shape: f32[64,128], index: 8, kind: input, shape index: {}]
  %s9 = inlined_call_operand.vmem [shape: f32[1,128], index: 9, kind: input, shape index: {}]
  %s10 = inlined_call_operand.hbm [shape: f32[2,128], index: 10, kind: output, shape index: {}]
  %s11 = sld [smem:[#allocation0]]
  $region70: #{tpu_custom_call.1} parent=0
    _
  %s13 = ssub.s32 1, %s11
  %s14 = scalar_select 0, %s13, %s11
  $region1: #{tpu_custom_call.1} parent=0
    #allocation3 [shape = 'u8[1024]{0}', space=smem, size = 0x400, scoped, tag = 'input window, operand 0, single buffered']
    #allocation4 [shape = 's32[1]{0}', space=sflag, size = 0x4, scoped, tag = 'scoped memory for tpu_custom_call.1']
    #allocation5 [shape = 's32[1]{0}', space=sflag, size = 0x4, scoped, tag = 'scoped memory for tpu_custom_call.1']
    #allocation6 [shape = 's32[1]{0}', space=sflag, size = 0x4, scoped, tag = 'scoped memory for tpu_custom_call.1']
    #allocation7 [shape = 'u8[32768]{0}', space=vmem, size = 0x8000, scoped, tag = 'input window, operand 3, single buffered']
    #allocation8 [shape = 'u8[65536]{0}', space=vmem, size = 0x10000, scoped, tag = 'input window, operand 4, single buffered']
    #allocation9 [shape = 's32[1]{0}', space=sflag, size = 0x4, scoped, tag = 'scoped memory for tpu_custom_call.1']
    #allocation10 [shape = 'u8[32768]{0}', space=vmem, size = 0x8000, scoped, tag = 'input window, operand 6, single buffered']
    #allocation11 [shape = 'u8[32768]{0}', space=vmem, size = 0x8000, scoped, tag = 'input window, operand 8, single buffered']
    #allocation12 [shape = 's32[1]{0}', space=sflag, size = 0x4, scoped, tag = 'scoped memory for tpu_custom_call.1']
    #allocation13 [shape = 'u8[1024]{0}', space=vmem, size = 0x400, scoped, tag = 'output window, operand 0, single buffered']
    %15 = vsyncpa [#allocation6], 0
    %16 = vsyncpa [#allocation4], 0
    %17 = vsyncpa [#allocation9], 0
    %18 = vsyncpa [#allocation12], 0
    %19 = vsyncpa [#allocation5], 0
    // Predicated region
    $region2: #{tpu_custom_call.1} parent=1 // pred_check
      _
    $region3: #{tpu_custom_call.1} parent=1 // pred_check_branch
      %21 = sbr.rel (0) target = $region5
    $region4: #{tpu_custom_call.1} parent=1 // pred_region
      %s23 = ssub.s32 32, 32
      %24 = vsyncadd [#allocation6], %s23
      %s26 = sshll.u32 %s0, 4
      %s27 = int_to_ptr.vmem [resolvable:$true] %s26
      %29 = dma.vmem_to_smem %s27, 32, [#allocation3], [#allocation6]
    $region5: #{tpu_custom_call.1} parent=1 // pred_fallthru
      _
    // Predicated region
    $region6: #{tpu_custom_call.1} parent=1 // pred_check
      _
    $region7: #{tpu_custom_call.1} parent=1 // pred_check_branch
      %31 = sbr.rel (0) target = $region9
    $region8: #{tpu_custom_call.1} parent=1 // pred_region
      _
    $region9: #{tpu_custom_call.1} parent=1 // pred_fallthru
      _
    // Predicated region
    $region10: #{tpu_custom_call.1} parent=1 // pred_check
      _
    $region11: #{tpu_custom_call.1} parent=1 // pred_check_branch
      %33 = sbr.rel (0) target = $region13
    $region12: #{tpu_custom_call.1} parent=1 // pred_region
      _
    $region13: #{tpu_custom_call.1} parent=1 // pred_fallthru
      _
    // Predicated region
    $region14: #{tpu_custom_call.1} parent=1 // pred_check
      _
    $region15: #{tpu_custom_call.1} parent=1 // pred_check_branch
      %35 = sbr.rel (0) target = $region17
    $region16: #{tpu_custom_call.1} parent=1 // pred_region
      %s37 = ssub.s32 1024, 1024
      %38 = vsyncadd [#allocation4], %s37
      %s39 = sshll.u32 [#allocation7], 4
      %s40 = int_to_ptr.vmem [resolvable:$true] %s39
      %45 = dma.hbm_to_vmem [thread:$0]  %s3, 1024, %s40, [#allocation4], 256, 256, 16
    $region17: #{tpu_custom_call.1} parent=1 // pred_fallthru
      _
    // Predicated region
    $region18: #{tpu_custom_call.1} parent=1 // pred_check
      _
    $region19: #{tpu_custom_call.1} parent=1 // pred_check_branch
      %47 = sbr.rel (0) target = $region21
    $region20: #{tpu_custom_call.1} parent=1 // pred_region
      %s49 = ssub.s32 2048, 2048
      %50 = vsyncadd [#allocation9], %s49
      %s51 = sshll.u32 [#allocation8], 4
      %s52 = int_to_ptr.vmem [resolvable:$true] %s51
      %57 = dma.hbm_to_vmem [thread:$0]  %s4, 2048, %s52, [#allocation9], 256, 256, 16
    $region21: #{tpu_custom_call.1} parent=1 // pred_fallthru
      _
    // Predicated region
    $region22: #{tpu_custom_call.1} parent=1 // pred_check
      _
    $region23: #{tpu_custom_call.1} parent=1 // pred_check_branch
      %59 = sbr.rel (0) target = $region25
    $region24: #{tpu_custom_call.1} parent=1 // pred_region
      _
    $region25: #{tpu_custom_call.1} parent=1 // pred_fallthru
      _
    // Predicated region
    $region26: #{tpu_custom_call.1} parent=1 // pred_check
      _
    $region27: #{tpu_custom_call.1} parent=1 // pred_check_branch
      %61 = sbr.rel (0) target = $region29
    $region28: #{tpu_custom_call.1} parent=1 // pred_region
      %s63 = ssub.s32 1024, 1024
      %64 = vsyncadd [#allocation9], %s63
      %s65 = sshll.u32 [#allocation10], 4
      %s66 = int_to_ptr.vmem [resolvable:$true] %s65
      %71 = dma.hbm_to_vmem [thread:$0]  %s6, 1024, %s66, [#allocation9], 128, 128, 8
    $region29: #{tpu_custom_call.1} parent=1 // pred_fallthru
      _
    // Predicated region
    $region30: #{tpu_custom_call.1} parent=1 // pred_check
      _
    $region31: #{tpu_custom_call.1} parent=1 // pred_check_branch
      %73 = sbr.rel (0) target = $region33
    $region32: #{tpu_custom_call.1} parent=1 // pred_region
      _
    $region33: #{tpu_custom_call.1} parent=1 // pred_fallthru
      _
    // Predicated region
    $region34: #{tpu_custom_call.1} parent=1 // pred_check
      _
    $region35: #{tpu_custom_call.1} parent=1 // pred_check_branch
      %75 = sbr.rel (0) target = $region37
    $region36: #{tpu_custom_call.1} parent=1 // pred_region
      %s77 = ssub.s32 1024, 1024
      %78 = vsyncadd [#allocation12], %s77
      %s79 = sshll.u32 [#allocation11], 4
      %s80 = int_to_ptr.vmem [resolvable:$true] %s79
      %85 = dma.hbm_to_vmem [thread:$0]  %s8, 1024, %s80, [#allocation12], 128, 128, 8
    $region37: #{tpu_custom_call.1} parent=1 // pred_fallthru
      _
    // Predicated region
    $region38: #{tpu_custom_call.1} parent=1 // pred_check
      _
    $region39: #{tpu_custom_call.1} parent=1 // pred_check_branch
      %87 = sbr.rel (0) target = $region41
    $region40: #{tpu_custom_call.1} parent=1 // pred_region
      _
    $region41: #{tpu_custom_call.1} parent=1 // pred_fallthru
      _
    // Predicated region
    $region42: #{tpu_custom_call.1} parent=1 // pred_check
      _
    $region43: #{tpu_custom_call.1} parent=1 // pred_check_branch
      %89 = sbr.rel (0) target = $region45
    $region44: #{tpu_custom_call.1} parent=1 // pred_region
      %90 = dma.done [#allocation6], 32
    $region45: #{tpu_custom_call.1} parent=1 // pred_fallthru
      _
    // Predicated region
    $region46: #{tpu_custom_call.1} parent=1 // pred_check
      _
    $region47: #{tpu_custom_call.1} parent=1 // pred_check_branch
      %92 = sbr.rel (0) target = $region49
    $region48: #{tpu_custom_call.1} parent=1 // pred_region
      %93 = dma.done [#allocation4], 1024
    $region49: #{tpu_custom_call.1} parent=1 // pred_fallthru
      _
    // Predicated region
    $region50: #{tpu_custom_call.1} parent=1 // pred_check
      _
    $region51: #{tpu_custom_call.1} parent=1 // pred_check_branch
      %95 = sbr.rel (0) target = $region53
    $region52: #{tpu_custom_call.1} parent=1 // pred_region
      %96 = dma.done [#allocation9], 2048
    $region53: #{tpu_custom_call.1} parent=1 // pred_fallthru
      _
    // Predicated region
    $region54: #{tpu_custom_call.1} parent=1 // pred_check
      _
    $region55: #{tpu_custom_call.1} parent=1 // pred_check_branch
      %98 = sbr.rel (0) target = $region57
    $region56: #{tpu_custom_call.1} parent=1 // pred_region
      %99 = dma.done [#allocation9], 1024
    $region57: #{tpu_custom_call.1} parent=1 // pred_fallthru
      _
    // Predicated region
    $region58: #{tpu_custom_call.1} parent=1 // pred_check
      _
    $region59: #{tpu_custom_call.1} parent=1 // pred_check_branch
      %101 = sbr.rel (0) target = $region61
    $region60: #{tpu_custom_call.1} parent=1 // pred_region
      %102 = dma.done [#allocation12], 1024
    $region61: #{tpu_custom_call.1} parent=1 // pred_fallthru
      _
    %103 = sfence
    %s104 = sld [smem:[#allocation3]]
    %s105 = scalar_lea.vmem %s1, %s104
    %v106 = vld [vmem:[%s105] sm:$0x1]
    %vm107 = vcmask 253952
    %108 = vst.msk [vmem:[#allocation2] sm:$0x1] %vm107, %v106
    %s109 = sld [smem:[#allocation3 + $0x80]]
    %s110 = scalar_lea.vmem %s1, %s109
    %v111 = vld [vmem:[%s110] sm:$0x1]
    %112 = vst.msk [vmem:[#allocation2 + $0x1] sm:$0x1] %vm107, %v111
    %s113 = sld [smem:[#allocation3 + $0x1]]
    %s114 = scalar_lea.vmem %s1, %s113
    %v115 = vld [vmem:[%s114] sm:$0x1]
    %116 = vst.msk [vmem:[#allocation2 + $0x2] sm:$0x1] %vm107, %v115
    %s117 = sld [smem:[#allocation3 + $0x81]]
    %s118 = scalar_lea.vmem %s1, %s117
    %v119 = vld [vmem:[%s118] sm:$0x1]
    %120 = vst.msk [vmem:[#allocation2 + $0x3] sm:$0x1] %vm107, %v119
    %s121 = sld [smem:[#allocation3 + $0x2]]
    %s122 = scalar_lea.vmem %s1, %s121
    %v123 = vld [vmem:[%s122] sm:$0x1]
    %124 = vst.msk [vmem:[#allocation2 + $0x4] sm:$0x1] %vm107, %v123
    %s125 = sld [smem:[#allocation3 + $0x82]]
    %s126 = scalar_lea.vmem %s1, %s125
    %v127 = vld [vmem:[%s126] sm:$0x1]
    %128 = vst.msk [vmem:[#allocation2 + $0x5] sm:$0x1] %vm107, %v127
    %s129 = sld [smem:[#allocation3 + $0x3]]
    %s130 = scalar_lea.vmem %s1, %s129
    %v131 = vld [vmem:[%s130] sm:$0x1]
    %132 = vst.msk [vmem:[#allocation2 + $0x6] sm:$0x1] %vm107, %v131
    %s133 = sld [smem:[#allocation3 + $0x83]]
    %s134 = scalar_lea.vmem %s1, %s133
    %v135 = vld [vmem:[%s134] sm:$0x1]
    %136 = vst.msk [vmem:[#allocation2 + $0x7] sm:$0x1] %vm107, %v135
    %s137 = sld [smem:[#allocation3 + $0x4]]
    %s138 = scalar_lea.vmem %s1, %s137
    %v139 = vld [vmem:[%s138] sm:$0x1]
    %140 = vst.msk [vmem:[#allocation2 + $0x8] sm:$0x1] %vm107, %v139
    %s141 = sld [smem:[#allocation3 + $0x84]]
    %s142 = scalar_lea.vmem %s1, %s141
    %v143 = vld [vmem:[%s142] sm:$0x1]
    %144 = vst.msk [vmem:[#allocation2 + $0x9] sm:$0x1] %vm107, %v143
    %s145 = sld [smem:[#allocation3 + $0x5]]
    %s146 = scalar_lea.vmem %s1, %s145
    %v147 = vld [vmem:[%s146] sm:$0x1]
    %148 = vst.msk [vmem:[#allocation2 + $0xa] sm:$0x1] %vm107, %v147
    %s149 = sld [smem:[#allocation3 + $0x85]]
    %s150 = scalar_lea.vmem %s1, %s149
    %v151 = vld [vmem:[%s150] sm:$0x1]
    %152 = vst.msk [vmem:[#allocation2 + $0xb] sm:$0x1] %vm107, %v151
    %s153 = sld [smem:[#allocation3 + $0x6]]
    %s154 = scalar_lea.vmem %s1, %s153
    %v155 = vld [vmem:[%s154] sm:$0x1]
    %156 = vst.msk [vmem:[#allocation2 + $0xc] sm:$0x1] %vm107, %v155
    %s157 = sld [smem:[#allocation3 + $0x86]]
    %s158 = scalar_lea.vmem %s1, %s157
    %v159 = vld [vmem:[%s158] sm:$0x1]
    %160 = vst.msk [vmem:[#allocation2 + $0xd] sm:$0x1] %vm107, %v159
    %s161 = sld [smem:[#allocation3 + $0x7]]
    %s162 = scalar_lea.vmem %s1, %s161
    %v163 = vld [vmem:[%s162] sm:$0x1]
    %164 = vst.msk [vmem:[#allocation2 + $0xe] sm:$0x1] %vm107, %v163
    %s165 = sld [smem:[#allocation3 + $0x87]]
    %s166 = scalar_lea.vmem %s1, %s165
    %v167 = vld [vmem:[%s166] sm:$0x1]
    %168 = vst.msk [vmem:[#allocation2 + $0xf] sm:$0x1] %vm107, %v167
    %v169 = vld [vmem:[#allocation2] sm:$0xff]
    %v170 = vld [vmem:[#allocation2 + $0x8] sm:$0xff]
    %v171 = vld [vmem:[%s2] sm:$0xff]
    %v172 = vld [vmem:[%s2 + $0x8] sm:$0xff]
    %v173 = vld [vmem:[%s2 + $0x10] sm:$0xff]
    %v174 = vld [vmem:[%s2 + $0x18] sm:$0xff]
    %v175 = vld [vmem:[%s2 + $0x20] sm:$0xff]
    %v176 = vld [vmem:[%s2 + $0x28] sm:$0xff]
    %v177 = vld [vmem:[%s2 + $0x30] sm:$0xff]
    %v178 = vld [vmem:[%s2 + $0x38] sm:$0xff]
    %v179 = vld [vmem:[%s5] sm:$0x3]
    %v181 = vlaneseq
    %v182 = vshrl.u32 %v181, 7
    %v183 = vsub.s32 0, %v182
    %v184 = vrot.slane %v179, %v183
    %v185 = vlaneseq
    %v186 = vshrl.u32 %v185, 7
    %v187 = vsub.s32 1, %v186
    %v188 = vrot.slane %v179, %v187
    %vm191 = vcmask 261120
    %v193 = vsel %vm191, %v169, 0
    %v196 = vsel %vm191, %v170, 0
    %198 = vmatprep.subr.mxu0 %v172
    %199 = vmatpush1.msra.mxu0 %v171
    %200 = vmatprep.subr.mxu0 %v174
    %201 = vmatpush1.msra.mxu0 %v173
    %202 = vmatprep.subr.mxu0 %v176
    %203 = vmatpush1.msra.mxu0 %v175
    %204 = vmatprep.subr.mxu0 %v178
    %205 = vmatpush1.msra.mxu0 %v177
    %206 = vmatprep.subr.mxu0 0.0
    %207 = vmatpush1.msra.mxu0 0.0
    %208 = vmatprep.subr.mxu0 0.0
    %209 = vmatpush1.msra.mxu0 0.0
    %210 = vmatprep.subr.mxu0 0.0
    %211 = vmatpush1.msra.mxu0 0.0
    %212 = vmatprep.subr.mxu0 0.0
    %213 = vmatpush1.msra.mxu0 0.0
    %214 = vmatprep.subr.mxu0 0.0
    %215 = vmatpush1.msra.mxu0 0.0
    %216 = vmatprep.subr.mxu0 0.0
    %217 = vmatpush1.msra.mxu0 0.0
    %218 = vmatprep.subr.mxu0 0.0
    %219 = vmatpush1.msra.mxu0 0.0
    %220 = vmatprep.subr.mxu0 0.0
    %221 = vmatpush1.msra.mxu0 0.0
    %222 = vmatprep.subr.mxu0 0.0
    %223 = vmatpush1.msra.mxu0 0.0
    %224 = vmatprep.subr.mxu0 0.0
    %225 = vmatpush1.msra.mxu0 0.0
    %226 = vmatprep.subr.mxu0 0.0
    %227 = vmatpush1.msra.mxu0 0.0
    %228 = vmatprep.subr.mxu0 0.0
    %229 = vmatpush1.msra.mxu0 0.0
    %230 = vmatprep.subr.mxu0 0.0
    %231 = vmatpush1.msra.mxu0 0.0
    %232 = vmatprep.subr.mxu0 0.0
    %233 = vmatpush1.msra.mxu0 0.0
    %234 = vmatprep.subr.mxu0 0.0
    %235 = vmatpush1.msra.mxu0 0.0
    %236 = vmatprep.subr.mxu0 0.0
    %237 = vmatpush1.msra.mxu0 0.0
    %238 = vmatprep.subr.mxu0 0.0
    %239 = vmatpush1.msra.mxu0 0.0
    %240 = vmatprep.subr.mxu0 0.0
    %241 = vmatpush1.msra.mxu0 0.0
    %242 = vmatprep.subr.mxu0 0.0
    %243 = vmatpush1.msra.mxu0 0.0
    %244 = vmatprep.subr.mxu0 0.0
    %245 = vmatpush1.msra.mxu0 0.0
    %246 = vmatprep.subr.mxu0 0.0
    %247 = vmatpush1.msra.mxu0 0.0
    %248 = vmatprep.subr.mxu0 0.0
    %249 = vmatpush1.msra.mxu0 0.0
    %250 = vmatprep.subr.mxu0 0.0
    %251 = vmatpush1.msra.mxu0 0.0
    %252 = vmatprep.subr.mxu0 0.0
    %253 = vmatpush1.msra.mxu0 0.0
    %254 = vmatprep.subr.mxu0 0.0
    %255 = vmatpush1.msra.mxu0 0.0
    %256 = vmatprep.subr.mxu0 0.0
    %257 = vmatpush1.msra.mxu0 0.0
    %258 = vmatprep.subr.mxu0 0.0
    %259 = vmatpush1.msra.mxu0 0.0
    %260 = vmatprep.subr.mxu0 0.0
    %261 = vmatpush1.msra.mxu0 0.0
    %262 = vmatprep.mubr.f32.mxu0 0.0
    %263 = vmatmul.mubr.f32.gmra.mrb[0].mxu0 %v193
    %v264 = vpop.f32.mrb[0].mxu0
    %v265 = vadd.f32 %v184, %v264
    %v266 = vpop.f32.mrb[0].mxu0
    %v267 = vadd.f32 %v188, %v266
    %268 = vmatprep.mubr.f32.mxu0 0.0
    %269 = vmatmul.mubr.f32.gmra.mrb[0].mxu0 %v196
    %v270 = vpop.f32.mrb[0].mxu0
    %v271 = vadd.f32 %v184, %v270
    %v272 = vpop.f32.mrb[0].mxu0
    %v273 = vadd.f32 %v188, %v272
    %274 = vdwg.mxu0
    %v275 = vld [vmem:[#allocation7] sm:$0xff]
    %v276 = vld [vmem:[#allocation7 + $0x8] sm:$0xff]
    %v277 = vld [vmem:[#allocation7 + $0x10] sm:$0xff]
    %v278 = vld [vmem:[#allocation7 + $0x18] sm:$0xff]
    %v279 = vld [vmem:[#allocation7 + $0x20] sm:$0xff]
    %v280 = vld [vmem:[#allocation7 + $0x28] sm:$0xff]
    %v281 = vld [vmem:[#allocation7 + $0x30] sm:$0xff]
    %v282 = vld [vmem:[#allocation7 + $0x38] sm:$0xff]
    %283 = vmatprep.subr.mxu0 %v276
    %284 = vmatpush1.msra.mxu0 %v275
    %285 = vmatprep.subr.mxu0 %v278
    %286 = vmatpush1.msra.mxu0 %v277
    %287 = vmatprep.subr.mxu0 %v280
    %288 = vmatpush1.msra.mxu0 %v279
    %289 = vmatprep.subr.mxu0 %v282
    %290 = vmatpush1.msra.mxu0 %v281
    %291 = vmatprep.subr.mxu0 0.0
    %292 = vmatpush1.msra.mxu0 0.0
    %293 = vmatprep.subr.mxu0 0.0
    %294 = vmatpush1.msra.mxu0 0.0
    %295 = vmatprep.subr.mxu0 0.0
    %296 = vmatpush1.msra.mxu0 0.0
    %297 = vmatprep.subr.mxu0 0.0
    %298 = vmatpush1.msra.mxu0 0.0
    %299 = vmatprep.subr.mxu0 0.0
    %300 = vmatpush1.msra.mxu0 0.0
    %301 = vmatprep.subr.mxu0 0.0
    %302 = vmatpush1.msra.mxu0 0.0
    %303 = vmatprep.subr.mxu0 0.0
    %304 = vmatpush1.msra.mxu0 0.0
    %305 = vmatprep.subr.mxu0 0.0
    %306 = vmatpush1.msra.mxu0 0.0
    %307 = vmatprep.subr.mxu0 0.0
    %308 = vmatpush1.msra.mxu0 0.0
    %309 = vmatprep.subr.mxu0 0.0
    %310 = vmatpush1.msra.mxu0 0.0
    %311 = vmatprep.subr.mxu0 0.0
    %312 = vmatpush1.msra.mxu0 0.0
    %313 = vmatprep.subr.mxu0 0.0
    %314 = vmatpush1.msra.mxu0 0.0
    %315 = vmatprep.subr.mxu0 0.0
    %316 = vmatpush1.msra.mxu0 0.0
    %317 = vmatprep.subr.mxu0 0.0
    %318 = vmatpush1.msra.mxu0 0.0
    %319 = vmatprep.subr.mxu0 0.0
    %320 = vmatpush1.msra.mxu0 0.0
    %321 = vmatprep.subr.mxu0 0.0
    %322 = vmatpush1.msra.mxu0 0.0
    %323 = vmatprep.subr.mxu0 0.0
    %324 = vmatpush1.msra.mxu0 0.0
    %325 = vmatprep.subr.mxu0 0.0
    %326 = vmatpush1.msra.mxu0 0.0
    %327 = vmatprep.subr.mxu0 0.0
    %328 = vmatpush1.msra.mxu0 0.0
    %329 = vmatprep.subr.mxu0 0.0
    %330 = vmatpush1.msra.mxu0 0.0
    %331 = vmatprep.subr.mxu0 0.0
    %332 = vmatpush1.msra.mxu0 0.0
    %333 = vmatprep.subr.mxu0 0.0
    %334 = vmatpush1.msra.mxu0 0.0
    %335 = vmatprep.subr.mxu0 0.0
    %336 = vmatpush1.msra.mxu0 0.0
    %337 = vmatprep.subr.mxu0 0.0
    %338 = vmatpush1.msra.mxu0 0.0
    %339 = vmatprep.subr.mxu0 0.0
    %340 = vmatpush1.msra.mxu0 0.0
    %341 = vmatprep.subr.mxu0 0.0
    %342 = vmatpush1.msra.mxu0 0.0
    %343 = vmatprep.subr.mxu0 0.0
    %344 = vmatpush1.msra.mxu0 0.0
    %345 = vmatprep.subr.mxu0 0.0
    %346 = vmatpush1.msra.mxu0 0.0
    %347 = vmatprep.mubr.f32.mxu0 0.0
    %348 = vmatmul.mubr.f32.gmra.mrb[0].mxu0 %v193
    %v349 = vpop.f32.mrb[0].mxu0
    %v350 = vadd.f32 0.0, %v349
    %v351 = vpop.f32.mrb[0].mxu0
    %v352 = vadd.f32 0.0, %v351
    %353 = vmatprep.mubr.f32.mxu0 0.0
    %354 = vmatmul.mubr.f32.gmra.mrb[0].mxu0 %v196
    %v355 = vpop.f32.mrb[0].mxu0
    %v356 = vadd.f32 0.0, %v355
    %v357 = vpop.f32.mrb[0].mxu0
    %v358 = vadd.f32 0.0, %v357
    %359 = vdwg.mxu0
    %v360 = vld [vmem:[#allocation8] sm:$0xff]
    %v361 = vld [vmem:[#allocation8 + $0x8] sm:$0xff]
    %v362 = vld [vmem:[#allocation8 + $0x10] sm:$0xff]
    %v363 = vld [vmem:[#allocation8 + $0x18] sm:$0xff]
    %v364 = vld [vmem:[#allocation8 + $0x20] sm:$0xff]
    %v365 = vld [vmem:[#allocation8 + $0x28] sm:$0xff]
    %v366 = vld [vmem:[#allocation8 + $0x30] sm:$0xff]
    %v367 = vld [vmem:[#allocation8 + $0x38] sm:$0xff]
    %v368 = vld [vmem:[#allocation8 + $0x40] sm:$0xff]
    %v369 = vld [vmem:[#allocation8 + $0x48] sm:$0xff]
    %v370 = vld [vmem:[#allocation8 + $0x50] sm:$0xff]
    %v371 = vld [vmem:[#allocation8 + $0x58] sm:$0xff]
    %v372 = vld [vmem:[#allocation8 + $0x60] sm:$0xff]
    %v373 = vld [vmem:[#allocation8 + $0x68] sm:$0xff]
    %v374 = vld [vmem:[#allocation8 + $0x70] sm:$0xff]
    %v375 = vld [vmem:[#allocation8 + $0x78] sm:$0xff]
    %v378 = vrot.slane %v356, 6
    %v379 = vrot.slane %v358, 6
    %v382 = vadd.f32 %v265, %v378
    %v383 = vadd.f32 %v267, %v379
    %vm384 = vcmask 523264
    %v386 = vsel %vm384, 0.0, 0
    %388 = vmatprep.subr.mxu0 %v361
    %389 = vmatpush1.msra.mxu0 %v360
    %390 = vmatprep.subr.mxu0 %v363
    %391 = vmatpush1.msra.mxu0 %v362
    %392 = vmatprep.subr.mxu0 %v365
    %393 = vmatpush1.msra.mxu0 %v364
    %394 = vmatprep.subr.mxu0 %v367
    %395 = vmatpush1.msra.mxu0 %v366
    %396 = vmatprep.subr.mxu0 %v369
    %397 = vmatpush1.msra.mxu0 %v368
    %398 = vmatprep.subr.mxu0 %v371
    %399 = vmatpush1.msra.mxu0 %v370
    %400 = vmatprep.subr.mxu0 %v373
    %401 = vmatpush1.msra.mxu0 %v372
    %402 = vmatprep.subr.mxu0 %v375
    %403 = vmatpush1.msra.mxu0 %v374
    %404 = vmatprep.subr.mxu0 0.0
    %405 = vmatpush1.msra.mxu0 0.0
    %406 = vmatprep.subr.mxu0 0.0
    %407 = vmatpush1.msra.mxu0 0.0
    %408 = vmatprep.subr.mxu0 0.0
    %409 = vmatpush1.msra.mxu0 0.0
    %410 = vmatprep.subr.mxu0 0.0
    %411 = vmatpush1.msra.mxu0 0.0
    %412 = vmatprep.subr.mxu0 0.0
    %413 = vmatpush1.msra.mxu0 0.0
    %414 = vmatprep.subr.mxu0 0.0
    %415 = vmatpush1.msra.mxu0 0.0
    %416 = vmatprep.subr.mxu0 0.0
    %417 = vmatpush1.msra.mxu0 0.0
    %418 = vmatprep.subr.mxu0 0.0
    %419 = vmatpush1.msra.mxu0 0.0
    %420 = vmatprep.subr.mxu0 0.0
    %421 = vmatpush1.msra.mxu0 0.0
    %422 = vmatprep.subr.mxu0 0.0
    %423 = vmatpush1.msra.mxu0 0.0
    %424 = vmatprep.subr.mxu0 0.0
    %425 = vmatpush1.msra.mxu0 0.0
    %426 = vmatprep.subr.mxu0 0.0
    %427 = vmatpush1.msra.mxu0 0.0
    %428 = vmatprep.subr.mxu0 0.0
    %429 = vmatpush1.msra.mxu0 0.0
    %430 = vmatprep.subr.mxu0 0.0
    %431 = vmatpush1.msra.mxu0 0.0
    %432 = vmatprep.subr.mxu0 0.0
    %433 = vmatpush1.msra.mxu0 0.0
    %434 = vmatprep.subr.mxu0 0.0
    %435 = vmatpush1.msra.mxu0 0.0
    %436 = vmatprep.subr.mxu0 0.0
    %437 = vmatpush1.msra.mxu0 0.0
    %438 = vmatprep.subr.mxu0 0.0
    %439 = vmatpush1.msra.mxu0 0.0
    %440 = vmatprep.subr.mxu0 0.0
    %441 = vmatpush1.msra.mxu0 0.0
    %442 = vmatprep.subr.mxu0 0.0
    %443 = vmatpush1.msra.mxu0 0.0
    %444 = vmatprep.subr.mxu0 0.0
    %445 = vmatpush1.msra.mxu0 0.0
    %446 = vmatprep.subr.mxu0 0.0
    %447 = vmatpush1.msra.mxu0 0.0
    %448 = vmatprep.subr.mxu0 0.0
    %449 = vmatpush1.msra.mxu0 0.0
    %450 = vmatprep.subr.mxu0 0.0
    %451 = vmatpush1.msra.mxu0 0.0
    %452 = vmatprep.mubr.f32.mxu0 0.0
    %453 = vmatmul.mubr.f32.gmra.mrb[0].mxu0 %v386
    %v454 = vpop.f32.mrb[0].mxu0
    %v455 = vadd.f32 0.0, %v454
    %v456 = vpop.f32.mrb[0].mxu0
    %v457 = vadd.f32 0.0, %v456
    %458 = vdwg.mxu0
    %v459 = vadd.f32 %v382, %v455
    %v460 = vadd.f32 %v383, %v457
    %v461 = vsub.f32 0.0, %v459
    %v462 = vmul.f32 %v461, 1.442695
    %v463 = vpow.pop %v462
    %v464 = vadd.f32 %v463, 1.0
    %v465 = vrcp.pop %v464
    %v466 = vtanh.pop %v460
    %v467 = vsub.f32 0.0, %v460
    %v468 = vmul.f32 %v467, 1.442695
    %v469 = vpow.pop %v468
    %v470 = vadd.f32 %v469, 1.0
    %v471 = vrcp.pop %v470
    %v472 = vmul.f32 %v465, 0.0
    %v473 = vmul.f32 %v465, %v466
    %475 = vrot.lane.b32.xlu0 %v473, 64
    %v476 = vpop.permute.xlu0 %475
    %v478 = vadd.f32 %v472, %v476
    %v479 = vtanh.pop %v478
    %v480 = vmul.f32 %v471, %v479
    %v481 = vrot.slane %v356, 2
    %v482 = vrot.slane %v358, 2
    %v485 = vadd.f32 %v265, %v481
    %v486 = vadd.f32 %v267, %v482
    %488 = vrot.lane.b32.xlu0 %v480, 64
    %v489 = vpop.permute.xlu0 %488
    %v490 = vsel %vm384, %v489, 0
    %492 = vmatprep.subr.mxu0 %v361
    %493 = vmatpush1.msra.mxu0 %v360
    %494 = vmatprep.subr.mxu0 %v363
    %495 = vmatpush1.msra.mxu0 %v362
    %496 = vmatprep.subr.mxu0 %v365
    %497 = vmatpush1.msra.mxu0 %v364
    %498 = vmatprep.subr.mxu0 %v367
    %499 = vmatpush1.msra.mxu0 %v366
    %500 = vmatprep.subr.mxu0 %v369
    %501 = vmatpush1.msra.mxu0 %v368
    %502 = vmatprep.subr.mxu0 %v371
    %503 = vmatpush1.msra.mxu0 %v370
    %504 = vmatprep.subr.mxu0 %v373
    %505 = vmatpush1.msra.mxu0 %v372
    %506 = vmatprep.subr.mxu0 %v375
    %507 = vmatpush1.msra.mxu0 %v374
    %508 = vmatprep.subr.mxu0 0.0
    %509 = vmatpush1.msra.mxu0 0.0
    %510 = vmatprep.subr.mxu0 0.0
    %511 = vmatpush1.msra.mxu0 0.0
    %512 = vmatprep.subr.mxu0 0.0
    %513 = vmatpush1.msra.mxu0 0.0
    %514 = vmatprep.subr.mxu0 0.0
    %515 = vmatpush1.msra.mxu0 0.0
    %516 = vmatprep.subr.mxu0 0.0
    %517 = vmatpush1.msra.mxu0 0.0
    %518 = vmatprep.subr.mxu0 0.0
    %519 = vmatpush1.msra.mxu0 0.0
    %520 = vmatprep.subr.mxu0 0.0
    %521 = vmatpush1.msra.mxu0 0.0
    %522 = vmatprep.subr.mxu0 0.0
    %523 = vmatpush1.msra.mxu0 0.0
    %524 = vmatprep.subr.mxu0 0.0
    %525 = vmatpush1.msra.mxu0 0.0
    %526 = vmatprep.subr.mxu0 0.0
    %527 = vmatpush1.msra.mxu0 0.0
    %528 = vmatprep.subr.mxu0 0.0
    %529 = vmatpush1.msra.mxu0 0.0
    %530 = vmatprep.subr.mxu0 0.0
    %531 = vmatpush1.msra.mxu0 0.0
    %532 = vmatprep.subr.mxu0 0.0
    %533 = vmatpush1.msra.mxu0 0.0
    %534 = vmatprep.subr.mxu0 0.0
    %535 = vmatpush1.msra.mxu0 0.0
    %536 = vmatprep.subr.mxu0 0.0
    %537 = vmatpush1.msra.mxu0 0.0
    %538 = vmatprep.subr.mxu0 0.0
    %539 = vmatpush1.msra.mxu0 0.0
    %540 = vmatprep.subr.mxu0 0.0
    %541 = vmatpush1.msra.mxu0 0.0
    %542 = vmatprep.subr.mxu0 0.0
    %543 = vmatpush1.msra.mxu0 0.0
    %544 = vmatprep.subr.mxu0 0.0
    %545 = vmatpush1.msra.mxu0 0.0
    %546 = vmatprep.subr.mxu0 0.0
    %547 = vmatpush1.msra.mxu0 0.0
    %548 = vmatprep.subr.mxu0 0.0
    %549 = vmatpush1.msra.mxu0 0.0
    %550 = vmatprep.subr.mxu0 0.0
    %551 = vmatpush1.msra.mxu0 0.0
    %552 = vmatprep.subr.mxu0 0.0
    %553 = vmatpush1.msra.mxu0 0.0
    %554 = vmatprep.subr.mxu0 0.0
    %555 = vmatpush1.msra.mxu0 0.0
    %556 = vmatprep.mubr.f32.mxu0 0.0
    %557 = vmatmul.mubr.f32.gmra.mrb[0].mxu0 %v490
    %v558 = vpop.f32.mrb[0].mxu0
    %v559 = vadd.f32 0.0, %v558
    %v560 = vpop.f32.mrb[0].mxu0
    %v561 = vadd.f32 0.0, %v560
    %562 = vdwg.mxu0
    %v565 = vrot.slane %v559, 6
    %v566 = vrot.slane %v561, 6
    %v569 = vadd.f32 %v485, %v565
    %v570 = vadd.f32 %v486, %v566
    %v571 = vsub.f32 0.0, %v569
    %v572 = vmul.f32 %v571, 1.442695
    %v573 = vpow.pop %v572
    %v574 = vadd.f32 %v573, 1.0
    %v575 = vrcp.pop %v574
    %v576 = vtanh.pop %v570
    %v577 = vsub.f32 0.0, %v570
    %v578 = vmul.f32 %v577, 1.442695
    %v579 = vpow.pop %v578
    %v580 = vadd.f32 %v579, 1.0
    %v581 = vrcp.pop %v580
    %v583 = vrot.slane %v478, 6
    %v585 = vmul.f32 %v575, %v583
    %v586 = vmul.f32 %v575, %v576
    %588 = vrot.lane.b32.xlu0 %v586, 64
    %v589 = vpop.permute.xlu0 %588
    %v591 = vadd.f32 %v585, %v589
    %v592 = vtanh.pop %v591
    %v593 = vmul.f32 %v581, %v592
    %v595 = vrot.slane %v593, 2
    %596 = vrot.lane.b32.xlu0 %v595, 64
    %v597 = vpop.permute.xlu0 %596
    %v598 = vsel %vm384, %v597, 0
    %600 = vmatprep.subr.mxu0 %v361
    %601 = vmatpush1.msra.mxu0 %v360
    %602 = vmatprep.subr.mxu0 %v363
    %603 = vmatpush1.msra.mxu0 %v362
    %604 = vmatprep.subr.mxu0 %v365
    %605 = vmatpush1.msra.mxu0 %v364
    %606 = vmatprep.subr.mxu0 %v367
    %607 = vmatpush1.msra.mxu0 %v366
    %608 = vmatprep.subr.mxu0 %v369
    %609 = vmatpush1.msra.mxu0 %v368
    %610 = vmatprep.subr.mxu0 %v371
    %611 = vmatpush1.msra.mxu0 %v370
    %612 = vmatprep.subr.mxu0 %v373
    %613 = vmatpush1.msra.mxu0 %v372
    %614 = vmatprep.subr.mxu0 %v375
    %615 = vmatpush1.msra.mxu0 %v374
    %616 = vmatprep.subr.mxu0 0.0
    %617 = vmatpush1.msra.mxu0 0.0
    %618 = vmatprep.subr.mxu0 0.0
    %619 = vmatpush1.msra.mxu0 0.0
    %620 = vmatprep.subr.mxu0 0.0
    %621 = vmatpush1.msra.mxu0 0.0
    %622 = vmatprep.subr.mxu0 0.0
    %623 = vmatpush1.msra.mxu0 0.0
    %624 = vmatprep.subr.mxu0 0.0
    %625 = vmatpush1.msra.mxu0 0.0
    %626 = vmatprep.subr.mxu0 0.0
    %627 = vmatpush1.msra.mxu0 0.0
    %628 = vmatprep.subr.mxu0 0.0
    %629 = vmatpush1.msra.mxu0 0.0
    %630 = vmatprep.subr.mxu0 0.0
    %631 = vmatpush1.msra.mxu0 0.0
    %632 = vmatprep.subr.mxu0 0.0
    %633 = vmatpush1.msra.mxu0 0.0
    %634 = vmatprep.subr.mxu0 0.0
    %635 = vmatpush1.msra.mxu0 0.0
    %636 = vmatprep.subr.mxu0 0.0
    %637 = vmatpush1.msra.mxu0 0.0
    %638 = vmatprep.subr.mxu0 0.0
    %639 = vmatpush1.msra.mxu0 0.0
    %640 = vmatprep.subr.mxu0 0.0
    %641 = vmatpush1.msra.mxu0 0.0
    %642 = vmatprep.subr.mxu0 0.0
    %643 = vmatpush1.msra.mxu0 0.0
    %644 = vmatprep.subr.mxu0 0.0
    %645 = vmatpush1.msra.mxu0 0.0
    %646 = vmatprep.subr.mxu0 0.0
    %647 = vmatpush1.msra.mxu0 0.0
    %648 = vmatprep.subr.mxu0 0.0
    %649 = vmatpush1.msra.mxu0 0.0
    %650 = vmatprep.subr.mxu0 0.0
    %651 = vmatpush1.msra.mxu0 0.0
    %652 = vmatprep.subr.mxu0 0.0
    %653 = vmatpush1.msra.mxu0 0.0
    %654 = vmatprep.subr.mxu0 0.0
    %655 = vmatpush1.msra.mxu0 0.0
    %656 = vmatprep.subr.mxu0 0.0
    %657 = vmatpush1.msra.mxu0 0.0
    %658 = vmatprep.subr.mxu0 0.0
    %659 = vmatpush1.msra.mxu0 0.0
    %660 = vmatprep.subr.mxu0 0.0
    %661 = vmatpush1.msra.mxu0 0.0
    %662 = vmatprep.subr.mxu0 0.0
    %663 = vmatpush1.msra.mxu0 0.0
    %664 = vmatprep.mubr.f32.mxu0 0.0
    %665 = vmatmul.mubr.f32.gmra.mrb[0].mxu0 %v598
    %v666 = vpop.f32.mrb[0].mxu0
    %v667 = vadd.f32 0.0, %v666
    %v668 = vpop.f32.mrb[0].mxu0
    %v669 = vadd.f32 0.0, %v668
    %670 = vdwg.mxu0
    %v673 = vrot.slane %v667, 4
    %v674 = vrot.slane %v669, 4
    %v677 = vadd.f32 %v382, %v673
    %v678 = vadd.f32 %v383, %v674
    %v679 = vsub.f32 0.0, %v677
    %v680 = vmul.f32 %v679, 1.442695
    %v681 = vpow.pop %v680
    %v682 = vadd.f32 %v681, 1.0
    %v683 = vrcp.pop %v682
    %v684 = vtanh.pop %v678
    %v685 = vsub.f32 0.0, %v678
    %v686 = vmul.f32 %v685, 1.442695
    %v687 = vpow.pop %v686
    %v688 = vadd.f32 %v687, 1.0
    %v689 = vrcp.pop %v688
    %v691 = vrot.slane %v591, 6
    %v693 = vmul.f32 %v683, %v691
    %v694 = vmul.f32 %v683, %v684
    %696 = vrot.lane.b32.xlu0 %v694, 64
    %v697 = vpop.permute.xlu0 %696
    %v699 = vadd.f32 %v693, %v697
    %v700 = vtanh.pop %v699
    %v701 = vmul.f32 %v689, %v700
    %v703 = vrot.slane %v701, 4
    %704 = vrot.lane.b32.xlu0 %v703, 64
    %v705 = vpop.permute.xlu0 %704
    %v706 = vsel %vm384, %v705, 0
    %708 = vmatprep.subr.mxu0 %v361
    %709 = vmatpush1.msra.mxu0 %v360
    %710 = vmatprep.subr.mxu0 %v363
    %711 = vmatpush1.msra.mxu0 %v362
    %712 = vmatprep.subr.mxu0 %v365
    %713 = vmatpush1.msra.mxu0 %v364
    %714 = vmatprep.subr.mxu0 %v367
    %715 = vmatpush1.msra.mxu0 %v366
    %716 = vmatprep.subr.mxu0 %v369
    %717 = vmatpush1.msra.mxu0 %v368
    %718 = vmatprep.subr.mxu0 %v371
    %719 = vmatpush1.msra.mxu0 %v370
    %720 = vmatprep.subr.mxu0 %v373
    %721 = vmatpush1.msra.mxu0 %v372
    %722 = vmatprep.subr.mxu0 %v375
    %723 = vmatpush1.msra.mxu0 %v374
    %724 = vmatprep.subr.mxu0 0.0
    %725 = vmatpush1.msra.mxu0 0.0
    %726 = vmatprep.subr.mxu0 0.0
    %727 = vmatpush1.msra.mxu0 0.0
    %728 = vmatprep.subr.mxu0 0.0
    %729 = vmatpush1.msra.mxu0 0.0
    %730 = vmatprep.subr.mxu0 0.0
    %731 = vmatpush1.msra.mxu0 0.0
    %732 = vmatprep.subr.mxu0 0.0
    %733 = vmatpush1.msra.mxu0 0.0
    %734 = vmatprep.subr.mxu0 0.0
    %735 = vmatpush1.msra.mxu0 0.0
    %736 = vmatprep.subr.mxu0 0.0
    %737 = vmatpush1.msra.mxu0 0.0
    %738 = vmatprep.subr.mxu0 0.0
    %739 = vmatpush1.msra.mxu0 0.0
    %740 = vmatprep.subr.mxu0 0.0
    %741 = vmatpush1.msra.mxu0 0.0
    %742 = vmatprep.subr.mxu0 0.0
    %743 = vmatpush1.msra.mxu0 0.0
    %744 = vmatprep.subr.mxu0 0.0
    %745 = vmatpush1.msra.mxu0 0.0
    %746 = vmatprep.subr.mxu0 0.0
    %747 = vmatpush1.msra.mxu0 0.0
    %748 = vmatprep.subr.mxu0 0.0
    %749 = vmatpush1.msra.mxu0 0.0
    %750 = vmatprep.subr.mxu0 0.0
    %751 = vmatpush1.msra.mxu0 0.0
    %752 = vmatprep.subr.mxu0 0.0
    %753 = vmatpush1.msra.mxu0 0.0
    %754 = vmatprep.subr.mxu0 0.0
    %755 = vmatpush1.msra.mxu0 0.0
    %756 = vmatprep.subr.mxu0 0.0
    %757 = vmatpush1.msra.mxu0 0.0
    %758 = vmatprep.subr.mxu0 0.0
    %759 = vmatpush1.msra.mxu0 0.0
    %760 = vmatprep.subr.mxu0 0.0
    %761 = vmatpush1.msra.mxu0 0.0
    %762 = vmatprep.subr.mxu0 0.0
    %763 = vmatpush1.msra.mxu0 0.0
    %764 = vmatprep.subr.mxu0 0.0
    %765 = vmatpush1.msra.mxu0 0.0
    %766 = vmatprep.subr.mxu0 0.0
    %767 = vmatpush1.msra.mxu0 0.0
    %768 = vmatprep.subr.mxu0 0.0
    %769 = vmatpush1.msra.mxu0 0.0
    %770 = vmatprep.subr.mxu0 0.0
    %771 = vmatpush1.msra.mxu0 0.0
    %772 = vmatprep.mubr.f32.mxu0 0.0
    %773 = vmatmul.mubr.f32.gmra.mrb[0].mxu0 %v706
    %v774 = vpop.f32.mrb[0].mxu0
    %v775 = vadd.f32 0.0, %v774
    %v776 = vpop.f32.mrb[0].mxu0
    %v777 = vadd.f32 0.0, %v776
    %778 = vdwg.mxu0
    %v781 = vrot.slane %v775, 2
    %v782 = vrot.slane %v777, 2
    %v785 = vadd.f32 %v485, %v781
    %v786 = vadd.f32 %v486, %v782
    %v787 = vsub.f32 0.0, %v785
    %v788 = vmul.f32 %v787, 1.442695
    %v789 = vpow.pop %v788
    %v790 = vadd.f32 %v789, 1.0
    %v791 = vrcp.pop %v790
    %v792 = vtanh.pop %v786
    %v793 = vsub.f32 0.0, %v786
    %v794 = vmul.f32 %v793, 1.442695
    %v795 = vpow.pop %v794
    %v796 = vadd.f32 %v795, 1.0
    %v797 = vrcp.pop %v796
    %v799 = vrot.slane %v699, 6
    %v801 = vmul.f32 %v791, %v799
    %v802 = vmul.f32 %v791, %v792
    %804 = vrot.lane.b32.xlu0 %v802, 64
    %v805 = vpop.permute.xlu0 %804
    %v807 = vadd.f32 %v801, %v805
    %v808 = vtanh.pop %v807
    %v809 = vmul.f32 %v797, %v808
    %v812 = vrot.slane %v350, 6
    %v813 = vrot.slane %v352, 6
    %v816 = vadd.f32 %v271, %v812
    %v817 = vadd.f32 %v273, %v813
    %v819 = vrot.slane %v809, 6
    %820 = vrot.lane.b32.xlu0 %v819, 64
    %v821 = vpop.permute.xlu0 %820
    %v822 = vsel %vm384, %v821, 0
    %824 = vmatprep.subr.mxu0 %v361
    %825 = vmatpush1.msra.mxu0 %v360
    %826 = vmatprep.subr.mxu0 %v363
    %827 = vmatpush1.msra.mxu0 %v362
    %828 = vmatprep.subr.mxu0 %v365
    %829 = vmatpush1.msra.mxu0 %v364
    %830 = vmatprep.subr.mxu0 %v367
    %831 = vmatpush1.msra.mxu0 %v366
    %832 = vmatprep.subr.mxu0 %v369
    %833 = vmatpush1.msra.mxu0 %v368
    %834 = vmatprep.subr.mxu0 %v371
    %835 = vmatpush1.msra.mxu0 %v370
    %836 = vmatprep.subr.mxu0 %v373
    %837 = vmatpush1.msra.mxu0 %v372
    %838 = vmatprep.subr.mxu0 %v375
    %839 = vmatpush1.msra.mxu0 %v374
    %840 = vmatprep.subr.mxu0 0.0
    %841 = vmatpush1.msra.mxu0 0.0
    %842 = vmatprep.subr.mxu0 0.0
    %843 = vmatpush1.msra.mxu0 0.0
    %844 = vmatprep.subr.mxu0 0.0
    %845 = vmatpush1.msra.mxu0 0.0
    %846 = vmatprep.subr.mxu0 0.0
    %847 = vmatpush1.msra.mxu0 0.0
    %848 = vmatprep.subr.mxu0 0.0
    %849 = vmatpush1.msra.mxu0 0.0
    %850 = vmatprep.subr.mxu0 0.0
    %851 = vmatpush1.msra.mxu0 0.0
    %852 = vmatprep.subr.mxu0 0.0
    %853 = vmatpush1.msra.mxu0 0.0
    %854 = vmatprep.subr.mxu0 0.0
    %855 = vmatpush1.msra.mxu0 0.0
    %856 = vmatprep.subr.mxu0 0.0
    %857 = vmatpush1.msra.mxu0 0.0
    %858 = vmatprep.subr.mxu0 0.0
    %859 = vmatpush1.msra.mxu0 0.0
    %860 = vmatprep.subr.mxu0 0.0
    %861 = vmatpush1.msra.mxu0 0.0
    %862 = vmatprep.subr.mxu0 0.0
    %863 = vmatpush1.msra.mxu0 0.0
    %864 = vmatprep.subr.mxu0 0.0
    %865 = vmatpush1.msra.mxu0 0.0
    %866 = vmatprep.subr.mxu0 0.0
    %867 = vmatpush1.msra.mxu0 0.0
    %868 = vmatprep.subr.mxu0 0.0
    %869 = vmatpush1.msra.mxu0 0.0
    %870 = vmatprep.subr.mxu0 0.0
    %871 = vmatpush1.msra.mxu0 0.0
    %872 = vmatprep.subr.mxu0 0.0
    %873 = vmatpush1.msra.mxu0 0.0
    %874 = vmatprep.subr.mxu0 0.0
    %875 = vmatpush1.msra.mxu0 0.0
    %876 = vmatprep.subr.mxu0 0.0
    %877 = vmatpush1.msra.mxu0 0.0
    %878 = vmatprep.subr.mxu0 0.0
    %879 = vmatpush1.msra.mxu0 0.0
    %880 = vmatprep.subr.mxu0 0.0
    %881 = vmatpush1.msra.mxu0 0.0
    %882 = vmatprep.subr.mxu0 0.0
    %883 = vmatpush1.msra.mxu0 0.0
    %884 = vmatprep.subr.mxu0 0.0
    %885 = vmatpush1.msra.mxu0 0.0
    %886 = vmatprep.subr.mxu0 0.0
    %887 = vmatpush1.msra.mxu0 0.0
    %888 = vmatprep.mubr.f32.mxu0 0.0
    %889 = vmatmul.mubr.f32.gmra.mrb[0].mxu0 %v822
    %v890 = vpop.f32.mrb[0].mxu0
    %v891 = vadd.f32 0.0, %v890
    %v892 = vpop.f32.mrb[0].mxu0
    %v893 = vadd.f32 0.0, %v892
    %894 = vdwg.mxu0
    %v895 = vadd.f32 %v816, %v891
    %v896 = vadd.f32 %v817, %v893
    %v897 = vsub.f32 0.0, %v895
    %v898 = vmul.f32 %v897, 1.442695
    %v899 = vpow.pop %v898
    %v900 = vadd.f32 %v899, 1.0
    %v901 = vrcp.pop %v900
    %v902 = vtanh.pop %v896
    %v903 = vsub.f32 0.0, %v896
    %v904 = vmul.f32 %v903, 1.442695
    %v905 = vpow.pop %v904
    %v906 = vadd.f32 %v905, 1.0
    %v907 = vrcp.pop %v906
    %v909 = vrot.slane %v807, 6
    %v911 = vmul.f32 %v901, %v909
    %v912 = vmul.f32 %v901, %v902
    %914 = vrot.lane.b32.xlu0 %v912, 64
    %v915 = vpop.permute.xlu0 %914
    %v917 = vadd.f32 %v911, %v915
    %v918 = vtanh.pop %v917
    %v919 = vmul.f32 %v907, %v918
    %v920 = vrot.slane %v350, 2
    %v921 = vrot.slane %v352, 2
    %v924 = vadd.f32 %v271, %v920
    %v925 = vadd.f32 %v273, %v921
    %927 = vrot.lane.b32.xlu0 %v919, 64
    %v928 = vpop.permute.xlu0 %927
    %v929 = vsel %vm384, %v928, 0
    %931 = vmatprep.subr.mxu0 %v361
    %932 = vmatpush1.msra.mxu0 %v360
    %933 = vmatprep.subr.mxu0 %v363
    %934 = vmatpush1.msra.mxu0 %v362
    %935 = vmatprep.subr.mxu0 %v365
    %936 = vmatpush1.msra.mxu0 %v364
    %937 = vmatprep.subr.mxu0 %v367
    %938 = vmatpush1.msra.mxu0 %v366
    %939 = vmatprep.subr.mxu0 %v369
    %940 = vmatpush1.msra.mxu0 %v368
    %941 = vmatprep.subr.mxu0 %v371
    %942 = vmatpush1.msra.mxu0 %v370
    %943 = vmatprep.subr.mxu0 %v373
    %944 = vmatpush1.msra.mxu0 %v372
    %945 = vmatprep.subr.mxu0 %v375
    %946 = vmatpush1.msra.mxu0 %v374
    %947 = vmatprep.subr.mxu0 0.0
    %948 = vmatpush1.msra.mxu0 0.0
    %949 = vmatprep.subr.mxu0 0.0
    %950 = vmatpush1.msra.mxu0 0.0
    %951 = vmatprep.subr.mxu0 0.0
    %952 = vmatpush1.msra.mxu0 0.0
    %953 = vmatprep.subr.mxu0 0.0
    %954 = vmatpush1.msra.mxu0 0.0
    %955 = vmatprep.subr.mxu0 0.0
    %956 = vmatpush1.msra.mxu0 0.0
    %957 = vmatprep.subr.mxu0 0.0
    %958 = vmatpush1.msra.mxu0 0.0
    %959 = vmatprep.subr.mxu0 0.0
    %960 = vmatpush1.msra.mxu0 0.0
    %961 = vmatprep.subr.mxu0 0.0
    %962 = vmatpush1.msra.mxu0 0.0
    %963 = vmatprep.subr.mxu0 0.0
    %964 = vmatpush1.msra.mxu0 0.0
    %965 = vmatprep.subr.mxu0 0.0
    %966 = vmatpush1.msra.mxu0 0.0
    %967 = vmatprep.subr.mxu0 0.0
    %968 = vmatpush1.msra.mxu0 0.0
    %969 = vmatprep.subr.mxu0 0.0
    %970 = vmatpush1.msra.mxu0 0.0
    %971 = vmatprep.subr.mxu0 0.0
    %972 = vmatpush1.msra.mxu0 0.0
    %973 = vmatprep.subr.mxu0 0.0
    %974 = vmatpush1.msra.mxu0 0.0
    %975 = vmatprep.subr.mxu0 0.0
    %976 = vmatpush1.msra.mxu0 0.0
    %977 = vmatprep.subr.mxu0 0.0
    %978 = vmatpush1.msra.mxu0 0.0
    %979 = vmatprep.subr.mxu0 0.0
    %980 = vmatpush1.msra.mxu0 0.0
    %981 = vmatprep.subr.mxu0 0.0
    %982 = vmatpush1.msra.mxu0 0.0
    %983 = vmatprep.subr.mxu0 0.0
    %984 = vmatpush1.msra.mxu0 0.0
    %985 = vmatprep.subr.mxu0 0.0
    %986 = vmatpush1.msra.mxu0 0.0
    %987 = vmatprep.subr.mxu0 0.0
    %988 = vmatpush1.msra.mxu0 0.0
    %989 = vmatprep.subr.mxu0 0.0
    %990 = vmatpush1.msra.mxu0 0.0
    %991 = vmatprep.subr.mxu0 0.0
    %992 = vmatpush1.msra.mxu0 0.0
    %993 = vmatprep.subr.mxu0 0.0
    %994 = vmatpush1.msra.mxu0 0.0
    %995 = vmatprep.mubr.f32.mxu0 0.0
    %996 = vmatmul.mubr.f32.gmra.mrb[0].mxu0 %v929
    %v997 = vpop.f32.mrb[0].mxu0
    %v998 = vadd.f32 0.0, %v997
    %v999 = vpop.f32.mrb[0].mxu0
    %v1000 = vadd.f32 0.0, %v999
    %1001 = vdwg.mxu0
    %v1004 = vrot.slane %v998, 6
    %v1005 = vrot.slane %v1000, 6
    %v1008 = vadd.f32 %v924, %v1004
    %v1009 = vadd.f32 %v925, %v1005
    %v1010 = vsub.f32 0.0, %v1008
    %v1011 = vmul.f32 %v1010, 1.442695
    %v1012 = vpow.pop %v1011
    %v1013 = vadd.f32 %v1012, 1.0
    %v1014 = vrcp.pop %v1013
    %v1015 = vtanh.pop %v1009
    %v1016 = vsub.f32 0.0, %v1009
    %v1017 = vmul.f32 %v1016, 1.442695
    %v1018 = vpow.pop %v1017
    %v1019 = vadd.f32 %v1018, 1.0
    %v1020 = vrcp.pop %v1019
    %v1022 = vrot.slane %v917, 6
    %v1024 = vmul.f32 %v1014, %v1022
    %v1025 = vmul.f32 %v1014, %v1015
    %1027 = vrot.lane.b32.xlu0 %v1025, 64
    %v1028 = vpop.permute.xlu0 %1027
    %v1030 = vadd.f32 %v1024, %v1028
    %v1031 = vtanh.pop %v1030
    %v1032 = vmul.f32 %v1020, %v1031
    %v1034 = vrot.slane %v1032, 2
    %1035 = vrot.lane.b32.xlu0 %v1034, 64
    %v1036 = vpop.permute.xlu0 %1035
    %v1037 = vsel %vm384, %v1036, 0
    %1039 = vmatprep.subr.mxu0 %v361
    %1040 = vmatpush1.msra.mxu0 %v360
    %1041 = vmatprep.subr.mxu0 %v363
    %1042 = vmatpush1.msra.mxu0 %v362
    %1043 = vmatprep.subr.mxu0 %v365
    %1044 = vmatpush1.msra.mxu0 %v364
    %1045 = vmatprep.subr.mxu0 %v367
    %1046 = vmatpush1.msra.mxu0 %v366
    %1047 = vmatprep.subr.mxu0 %v369
    %1048 = vmatpush1.msra.mxu0 %v368
    %1049 = vmatprep.subr.mxu0 %v371
    %1050 = vmatpush1.msra.mxu0 %v370
    %1051 = vmatprep.subr.mxu0 %v373
    %1052 = vmatpush1.msra.mxu0 %v372
    %1053 = vmatprep.subr.mxu0 %v375
    %1054 = vmatpush1.msra.mxu0 %v374
    %1055 = vmatprep.subr.mxu0 0.0
    %1056 = vmatpush1.msra.mxu0 0.0
    %1057 = vmatprep.subr.mxu0 0.0
    %1058 = vmatpush1.msra.mxu0 0.0
    %1059 = vmatprep.subr.mxu0 0.0
    %1060 = vmatpush1.msra.mxu0 0.0
    %1061 = vmatprep.subr.mxu0 0.0
    %1062 = vmatpush1.msra.mxu0 0.0
    %1063 = vmatprep.subr.mxu0 0.0
    %1064 = vmatpush1.msra.mxu0 0.0
    %1065 = vmatprep.subr.mxu0 0.0
    %1066 = vmatpush1.msra.mxu0 0.0
    %1067 = vmatprep.subr.mxu0 0.0
    %1068 = vmatpush1.msra.mxu0 0.0
    %1069 = vmatprep.subr.mxu0 0.0
    %1070 = vmatpush1.msra.mxu0 0.0
    %1071 = vmatprep.subr.mxu0 0.0
    %1072 = vmatpush1.msra.mxu0 0.0
    %1073 = vmatprep.subr.mxu0 0.0
    %1074 = vmatpush1.msra.mxu0 0.0
    %1075 = vmatprep.subr.mxu0 0.0
    %1076 = vmatpush1.msra.mxu0 0.0
    %1077 = vmatprep.subr.mxu0 0.0
    %1078 = vmatpush1.msra.mxu0 0.0
    %1079 = vmatprep.subr.mxu0 0.0
    %1080 = vmatpush1.msra.mxu0 0.0
    %1081 = vmatprep.subr.mxu0 0.0
    %1082 = vmatpush1.msra.mxu0 0.0
    %1083 = vmatprep.subr.mxu0 0.0
    %1084 = vmatpush1.msra.mxu0 0.0
    %1085 = vmatprep.subr.mxu0 0.0
    %1086 = vmatpush1.msra.mxu0 0.0
    %1087 = vmatprep.subr.mxu0 0.0
    %1088 = vmatpush1.msra.mxu0 0.0
    %1089 = vmatprep.subr.mxu0 0.0
    %1090 = vmatpush1.msra.mxu0 0.0
    %1091 = vmatprep.subr.mxu0 0.0
    %1092 = vmatpush1.msra.mxu0 0.0
    %1093 = vmatprep.subr.mxu0 0.0
    %1094 = vmatpush1.msra.mxu0 0.0
    %1095 = vmatprep.subr.mxu0 0.0
    %1096 = vmatpush1.msra.mxu0 0.0
    %1097 = vmatprep.subr.mxu0 0.0
    %1098 = vmatpush1.msra.mxu0 0.0
    %1099 = vmatprep.subr.mxu0 0.0
    %1100 = vmatpush1.msra.mxu0 0.0
    %1101 = vmatprep.subr.mxu0 0.0
    %1102 = vmatpush1.msra.mxu0 0.0
    %1103 = vmatprep.mubr.f32.mxu0 0.0
    %1104 = vmatmul.mubr.f32.gmra.mrb[0].mxu0 %v1037
    %v1105 = vpop.f32.mrb[0].mxu0
    %v1106 = vadd.f32 0.0, %v1105
    %v1107 = vpop.f32.mrb[0].mxu0
    %v1108 = vadd.f32 0.0, %v1107
    %1109 = vdwg.mxu0
    %v1112 = vrot.slane %v1106, 4
    %v1113 = vrot.slane %v1108, 4
    %v1116 = vadd.f32 %v816, %v1112
    %v1117 = vadd.f32 %v817, %v1113
    %v1118 = vsub.f32 0.0, %v1116
    %v1119 = vmul.f32 %v1118, 1.442695
    %v1120 = vpow.pop %v1119
    %v1121 = vadd.f32 %v1120, 1.0
    %v1122 = vrcp.pop %v1121
    %v1123 = vtanh.pop %v1117
    %v1124 = vsub.f32 0.0, %v1117
    %v1125 = vmul.f32 %v1124, 1.442695
    %v1126 = vpow.pop %v1125
    %v1127 = vadd.f32 %v1126, 1.0
    %v1128 = vrcp.pop %v1127
    %v1130 = vrot.slane %v1030, 6
    %v1132 = vmul.f32 %v1122, %v1130
    %v1133 = vmul.f32 %v1122, %v1123
    %1135 = vrot.lane.b32.xlu0 %v1133, 64
    %v1136 = vpop.permute.xlu0 %1135
    %v1138 = vadd.f32 %v1132, %v1136
    %v1139 = vtanh.pop %v1138
    %v1140 = vmul.f32 %v1128, %v1139
    %v1142 = vrot.slane %v1140, 4
    %1143 = vrot.lane.b32.xlu0 %v1142, 64
    %v1144 = vpop.permute.xlu0 %1143
    %v1145 = vsel %vm384, %v1144, 0
    %1147 = vmatprep.subr.mxu0 %v361
    %1148 = vmatpush1.msra.mxu0 %v360
    %1149 = vmatprep.subr.mxu0 %v363
    %1150 = vmatpush1.msra.mxu0 %v362
    %1151 = vmatprep.subr.mxu0 %v365
    %1152 = vmatpush1.msra.mxu0 %v364
    %1153 = vmatprep.subr.mxu0 %v367
    %1154 = vmatpush1.msra.mxu0 %v366
    %1155 = vmatprep.subr.mxu0 %v369
    %1156 = vmatpush1.msra.mxu0 %v368
    %1157 = vmatprep.subr.mxu0 %v371
    %1158 = vmatpush1.msra.mxu0 %v370
    %1159 = vmatprep.subr.mxu0 %v373
    %1160 = vmatpush1.msra.mxu0 %v372
    %1161 = vmatprep.subr.mxu0 %v375
    %1162 = vmatpush1.msra.mxu0 %v374
    %1163 = vmatprep.subr.mxu0 0.0
    %1164 = vmatpush1.msra.mxu0 0.0
    %1165 = vmatprep.subr.mxu0 0.0
    %1166 = vmatpush1.msra.mxu0 0.0
    %1167 = vmatprep.subr.mxu0 0.0
    %1168 = vmatpush1.msra.mxu0 0.0
    %1169 = vmatprep.subr.mxu0 0.0
    %1170 = vmatpush1.msra.mxu0 0.0
    %1171 = vmatprep.subr.mxu0 0.0
    %1172 = vmatpush1.msra.mxu0 0.0
    %1173 = vmatprep.subr.mxu0 0.0
    %1174 = vmatpush1.msra.mxu0 0.0
    %1175 = vmatprep.subr.mxu0 0.0
    %1176 = vmatpush1.msra.mxu0 0.0
    %1177 = vmatprep.subr.mxu0 0.0
    %1178 = vmatpush1.msra.mxu0 0.0
    %1179 = vmatprep.subr.mxu0 0.0
    %1180 = vmatpush1.msra.mxu0 0.0
    %1181 = vmatprep.subr.mxu0 0.0
    %1182 = vmatpush1.msra.mxu0 0.0
    %1183 = vmatprep.subr.mxu0 0.0
    %1184 = vmatpush1.msra.mxu0 0.0
    %1185 = vmatprep.subr.mxu0 0.0
    %1186 = vmatpush1.msra.mxu0 0.0
    %1187 = vmatprep.subr.mxu0 0.0
    %1188 = vmatpush1.msra.mxu0 0.0
    %1189 = vmatprep.subr.mxu0 0.0
    %1190 = vmatpush1.msra.mxu0 0.0
    %1191 = vmatprep.subr.mxu0 0.0
    %1192 = vmatpush1.msra.mxu0 0.0
    %1193 = vmatprep.subr.mxu0 0.0
    %1194 = vmatpush1.msra.mxu0 0.0
    %1195 = vmatprep.subr.mxu0 0.0
    %1196 = vmatpush1.msra.mxu0 0.0
    %1197 = vmatprep.subr.mxu0 0.0
    %1198 = vmatpush1.msra.mxu0 0.0
    %1199 = vmatprep.subr.mxu0 0.0
    %1200 = vmatpush1.msra.mxu0 0.0
    %1201 = vmatprep.subr.mxu0 0.0
    %1202 = vmatpush1.msra.mxu0 0.0
    %1203 = vmatprep.subr.mxu0 0.0
    %1204 = vmatpush1.msra.mxu0 0.0
    %1205 = vmatprep.subr.mxu0 0.0
    %1206 = vmatpush1.msra.mxu0 0.0
    %1207 = vmatprep.subr.mxu0 0.0
    %1208 = vmatpush1.msra.mxu0 0.0
    %1209 = vmatprep.subr.mxu0 0.0
    %1210 = vmatpush1.msra.mxu0 0.0
    %1211 = vmatprep.mubr.f32.mxu0 0.0
    %1212 = vmatmul.mubr.f32.gmra.mrb[0].mxu0 %v1145
    %v1213 = vpop.f32.mrb[0].mxu0
    %v1214 = vadd.f32 0.0, %v1213
    %v1215 = vpop.f32.mrb[0].mxu0
    %v1216 = vadd.f32 0.0, %v1215
    %1217 = vdwg.mxu0
    %v1220 = vrot.slane %v1214, 2
    %v1221 = vrot.slane %v1216, 2
    %v1224 = vadd.f32 %v924, %v1220
    %v1225 = vadd.f32 %v925, %v1221
    %v1226 = vsub.f32 0.0, %v1224
    %v1227 = vmul.f32 %v1226, 1.442695
    %v1228 = vpow.pop %v1227
    %v1229 = vadd.f32 %v1228, 1.0
    %v1230 = vrcp.pop %v1229
    %v1231 = vtanh.pop %v1225
    %v1232 = vsub.f32 0.0, %v1225
    %v1233 = vmul.f32 %v1232, 1.442695
    %v1234 = vpow.pop %v1233
    %v1235 = vadd.f32 %v1234, 1.0
    %v1236 = vrcp.pop %v1235
    %v1238 = vrot.slane %v1138, 6
    %v1240 = vmul.f32 %v1230, %v1238
    %v1241 = vmul.f32 %v1230, %v1231
    %1243 = vrot.lane.b32.xlu0 %v1241, 64
    %v1244 = vpop.permute.xlu0 %1243
    %v1246 = vadd.f32 %v1240, %v1244
    %v1247 = vtanh.pop %v1246
    %v1248 = vmul.f32 %v1236, %v1247
    %v1249 = vld [vmem:[#allocation10] sm:$0xff]
    %v1250 = vld [vmem:[#allocation10 + $0x8] sm:$0xff]
    %v1251 = vld [vmem:[#allocation10 + $0x10] sm:$0xff]
    %v1252 = vld [vmem:[#allocation10 + $0x18] sm:$0xff]
    %v1253 = vld [vmem:[#allocation10 + $0x20] sm:$0xff]
    %v1254 = vld [vmem:[#allocation10 + $0x28] sm:$0xff]
    %v1255 = vld [vmem:[#allocation10 + $0x30] sm:$0xff]
    %v1256 = vld [vmem:[#allocation10 + $0x38] sm:$0xff]
    %v1257 = vld [vmem:[%s7] sm:$0x1]
    %v1259 = vlaneseq
    %v1260 = vshrl.u32 %v1259, 7
    %v1261 = vsub.s32 0, %v1260
    %v1262 = vrot.slane %v1257, %v1261
    %v1265 = vrot.slane %v1248, 6
    %1266 = vrot.lane.b32.xlu0 %v1265, 64
    %v1267 = vpop.permute.xlu0 %1266
    %v1268 = vsel %vm384, %v1267, 0
    %1270 = vmatprep.subr.mxu0 0.0
    %1271 = vmatpush1.msra.mxu0 %v1249
    %1272 = vmatprep.subr.mxu0 0.0
    %1273 = vmatpush1.msra.mxu0 %v1250
    %1274 = vmatprep.subr.mxu0 0.0
    %1275 = vmatpush1.msra.mxu0 %v1251
    %1276 = vmatprep.subr.mxu0 0.0
    %1277 = vmatpush1.msra.mxu0 %v1252
    %1278 = vmatprep.subr.mxu0 0.0
    %1279 = vmatpush1.msra.mxu0 %v1253
    %1280 = vmatprep.subr.mxu0 0.0
    %1281 = vmatpush1.msra.mxu0 %v1254
    %1282 = vmatprep.subr.mxu0 0.0
    %1283 = vmatpush1.msra.mxu0 %v1255
    %1284 = vmatprep.subr.mxu0 0.0
    %1285 = vmatpush1.msra.mxu0 %v1256
    %1286 = vmatprep.subr.mxu0 0.0
    %1287 = vmatpush1.msra.mxu0 0.0
    %1288 = vmatprep.subr.mxu0 0.0
    %1289 = vmatpush1.msra.mxu0 0.0
    %1290 = vmatprep.subr.mxu0 0.0
    %1291 = vmatpush1.msra.mxu0 0.0
    %1292 = vmatprep.subr.mxu0 0.0
    %1293 = vmatpush1.msra.mxu0 0.0
    %1294 = vmatprep.subr.mxu0 0.0
    %1295 = vmatpush1.msra.mxu0 0.0
    %1296 = vmatprep.subr.mxu0 0.0
    %1297 = vmatpush1.msra.mxu0 0.0
    %1298 = vmatprep.subr.mxu0 0.0
    %1299 = vmatpush1.msra.mxu0 0.0
    %1300 = vmatprep.subr.mxu0 0.0
    %1301 = vmatpush1.msra.mxu0 0.0
    %1302 = vmatprep.subr.mxu0 0.0
    %1303 = vmatpush1.msra.mxu0 0.0
    %1304 = vmatprep.subr.mxu0 0.0
    %1305 = vmatpush1.msra.mxu0 0.0
    %1306 = vmatprep.subr.mxu0 0.0
    %1307 = vmatpush1.msra.mxu0 0.0
    %1308 = vmatprep.subr.mxu0 0.0
    %1309 = vmatpush1.msra.mxu0 0.0
    %1310 = vmatprep.subr.mxu0 0.0
    %1311 = vmatpush1.msra.mxu0 0.0
    %1312 = vmatprep.subr.mxu0 0.0
    %1313 = vmatpush1.msra.mxu0 0.0
    %1314 = vmatprep.subr.mxu0 0.0
    %1315 = vmatpush1.msra.mxu0 0.0
    %1316 = vmatprep.subr.mxu0 0.0
    %1317 = vmatpush1.msra.mxu0 0.0
    %1318 = vmatprep.subr.mxu0 0.0
    %1319 = vmatpush1.msra.mxu0 0.0
    %1320 = vmatprep.subr.mxu0 0.0
    %1321 = vmatpush1.msra.mxu0 0.0
    %1322 = vmatprep.subr.mxu0 0.0
    %1323 = vmatpush1.msra.mxu0 0.0
    %1324 = vmatprep.subr.mxu0 0.0
    %1325 = vmatpush1.msra.mxu0 0.0
    %1326 = vmatprep.subr.mxu0 0.0
    %1327 = vmatpush1.msra.mxu0 0.0
    %1328 = vmatprep.subr.mxu0 0.0
    %1329 = vmatpush1.msra.mxu0 0.0
    %1330 = vmatprep.subr.mxu0 0.0
    %1331 = vmatpush1.msra.mxu0 0.0
    %1332 = vmatprep.subr.mxu0 0.0
    %1333 = vmatpush1.msra.mxu0 0.0
    %1334 = vmatprep.mubr.f32.mxu0 0.0
    %1335 = vmatmul.mubr.f32.gmra.mrb[0].mxu0 %v1268
    %v1336 = vpop.f32.mrb[0].mxu0
    %v1337 = vadd.f32 %v1262, %v1336
    %v1338 = vpop.f32.mrb[0].mxu0
    %1339 = vdwg.mxu0
    %v1340 = vmax.f32 %v1337, 0.0
    %v1341 = vld [vmem:[#allocation11] sm:$0xff]
    %v1342 = vld [vmem:[#allocation11 + $0x8] sm:$0xff]
    %v1343 = vld [vmem:[#allocation11 + $0x10] sm:$0xff]
    %v1344 = vld [vmem:[#allocation11 + $0x18] sm:$0xff]
    %v1345 = vld [vmem:[#allocation11 + $0x20] sm:$0xff]
    %v1346 = vld [vmem:[#allocation11 + $0x28] sm:$0xff]
    %v1347 = vld [vmem:[#allocation11 + $0x30] sm:$0xff]
    %v1348 = vld [vmem:[#allocation11 + $0x38] sm:$0xff]
    %v1349 = vld [vmem:[%s9] sm:$0x1]
    %v1351 = vlaneseq
    %v1352 = vshrl.u32 %v1351, 7
    %v1353 = vsub.s32 0, %v1352
    %v1354 = vrot.slane %v1349, %v1353
    %v1357 = vsel %vm384, %v1340, 0
    %1359 = vmatprep.subr.mxu0 0.0
    %1360 = vmatpush1.msra.mxu0 %v1341
    %1361 = vmatprep.subr.mxu0 0.0
    %1362 = vmatpush1.msra.mxu0 %v1342
    %1363 = vmatprep.subr.mxu0 0.0
    %1364 = vmatpush1.msra.mxu0 %v1343
    %1365 = vmatprep.subr.mxu0 0.0
    %1366 = vmatpush1.msra.mxu0 %v1344
    %1367 = vmatprep.subr.mxu0 0.0
    %1368 = vmatpush1.msra.mxu0 %v1345
    %1369 = vmatprep.subr.mxu0 0.0
    %1370 = vmatpush1.msra.mxu0 %v1346
    %1371 = vmatprep.subr.mxu0 0.0
    %1372 = vmatpush1.msra.mxu0 %v1347
    %1373 = vmatprep.subr.mxu0 0.0
    %1374 = vmatpush1.msra.mxu0 %v1348
    %1375 = vmatprep.subr.mxu0 0.0
    %1376 = vmatpush1.msra.mxu0 0.0
    %1377 = vmatprep.subr.mxu0 0.0
    %1378 = vmatpush1.msra.mxu0 0.0
    %1379 = vmatprep.subr.mxu0 0.0
    %1380 = vmatpush1.msra.mxu0 0.0
    %1381 = vmatprep.subr.mxu0 0.0
    %1382 = vmatpush1.msra.mxu0 0.0
    %1383 = vmatprep.subr.mxu0 0.0
    %1384 = vmatpush1.msra.mxu0 0.0
    %1385 = vmatprep.subr.mxu0 0.0
    %1386 = vmatpush1.msra.mxu0 0.0
    %1387 = vmatprep.subr.mxu0 0.0
    %1388 = vmatpush1.msra.mxu0 0.0
    %1389 = vmatprep.subr.mxu0 0.0
    %1390 = vmatpush1.msra.mxu0 0.0
    %1391 = vmatprep.subr.mxu0 0.0
    %1392 = vmatpush1.msra.mxu0 0.0
    %1393 = vmatprep.subr.mxu0 0.0
    %1394 = vmatpush1.msra.mxu0 0.0
    %1395 = vmatprep.subr.mxu0 0.0
    %1396 = vmatpush1.msra.mxu0 0.0
    %1397 = vmatprep.subr.mxu0 0.0
    %1398 = vmatpush1.msra.mxu0 0.0
    %1399 = vmatprep.subr.mxu0 0.0
    %1400 = vmatpush1.msra.mxu0 0.0
    %1401 = vmatprep.subr.mxu0 0.0
    %1402 = vmatpush1.msra.mxu0 0.0
    %1403 = vmatprep.subr.mxu0 0.0
    %1404 = vmatpush1.msra.mxu0 0.0
    %1405 = vmatprep.subr.mxu0 0.0
    %1406 = vmatpush1.msra.mxu0 0.0
    %1407 = vmatprep.subr.mxu0 0.0
    %1408 = vmatpush1.msra.mxu0 0.0
    %1409 = vmatprep.subr.mxu0 0.0
    %1410 = vmatpush1.msra.mxu0 0.0
    %1411 = vmatprep.subr.mxu0 0.0
    %1412 = vmatpush1.msra.mxu0 0.0
    %1413 = vmatprep.subr.mxu0 0.0
    %1414 = vmatpush1.msra.mxu0 0.0
    %1415 = vmatprep.subr.mxu0 0.0
    %1416 = vmatpush1.msra.mxu0 0.0
    %1417 = vmatprep.subr.mxu0 0.0
    %1418 = vmatpush1.msra.mxu0 0.0
    %1419 = vmatprep.subr.mxu0 0.0
    %1420 = vmatpush1.msra.mxu0 0.0
    %1421 = vmatprep.subr.mxu0 0.0
    %1422 = vmatpush1.msra.mxu0 0.0
    %1423 = vmatprep.mubr.f32.mxu0 0.0
    %1424 = vmatmul.mubr.f32.gmra.mrb[0].mxu0 %v1357
    %v1425 = vpop.f32.mrb[0].mxu0
    %v1426 = vadd.f32 %v1354, %v1425
    %v1427 = vpop.f32.mrb[0].mxu0
    %1428 = vdwg.mxu0
    %v1429 = vsub.f32 0.0, %v1426
    %v1430 = vmul.f32 %v1429, 1.442695
    %v1431 = vpow.pop %v1430
    %v1432 = vadd.f32 %v1431, 1.0
    %v1433 = vrcp.pop %v1432
    %1434 = vst [vmem:[#allocation13] sm:$0x3] %v1433
    // Predicated region
    $region62: #{tpu_custom_call.1} parent=1 // pred_check
      _
    $region63: #{tpu_custom_call.1} parent=1 // pred_check_branch
      %1436 = sbr.rel (0) target = $region65
    $region64: #{tpu_custom_call.1} parent=1 // pred_region
      %s1438 = ssub.s32 32, 32
      %1439 = vsyncadd [#allocation5], %s1438
      %s1441 = sshll.u32 [#allocation13], 4
      %s1442 = int_to_ptr.vmem [resolvable:$true] %s1441
      %1444 = dma.vmem_to_hbm [thread:$0]  %s1442, 32, %s10, [#allocation5]
    $region65: #{tpu_custom_call.1} parent=1 // pred_fallthru
      _
    // Predicated region
    $region66: #{tpu_custom_call.1} parent=1 // pred_check
      _
    $region67: #{tpu_custom_call.1} parent=1 // pred_check_branch
      %1446 = sbr.rel (0) target = $region69
    $region68: #{tpu_custom_call.1} parent=1 // pred_region
      %1447 = dma.done [#allocation5], 32
    $region69: #{tpu_custom_call.1} parent=1 // pred_fallthru
      _
    %1448 = vsyncpa [#allocation4], 1
    %1449 = vsyncpa [#allocation9], 1
    %1450 = vsyncpa [#allocation12], 1
    %1451 = vsyncpa [#allocation5], 1
    %1452 = vsyncpa [#allocation6], 1

</llo_original>
